<compile_context>
chip_gen: v7x
topology: tpu7x:2x2x1
jax: 0.10.0
libtpu: 0.0.40
codegen_flags: <defaults>
</compile_context>

<pallas_src>
import numpy as np

import jax
import jax.numpy as jnp
from jax.experimental import pallas as pl
from jax.experimental.pallas import tpu as pltpu


# ------------------------------------------------------------------ tap tables
# ConvTranspose2d(k=4, s=2, p=1): output row phase r pulls from padded-patch row
# offset p (input row ob + p - 1) with kernel tap ky.  Same table for columns.
_TAPS_ROW = ((0, 0, 3), (0, 1, 1), (1, 1, 2), (1, 2, 0))      # (r, p, ky)
_TAPS_COL = {0: ((0, 3), (1, 1)), 1: ((1, 2), (2, 0))}        # s -> ((q, kx), ...)


# -------------------------------------------------------- host-side constants

def _build_W1_cat(w1):
    """[W1_0 | W1_1 | W1_2 | W1_3] : (Z, 4*4*F0).  W1_i[z, j*F0+c] = w1[z,c,i,j]
    (tconv k=4, s=1, p=0 applied to a 1x1 input; i = output spatial row)."""
    z, f0 = w1.shape[0], w1.shape[1]
    blocks = [np.transpose(w1[:, :, i, :], (0, 2, 1)).reshape(z, 4 * f0)
              for i in range(4)]
    return np.concatenate(blocks, axis=1).astype(np.float32)


def _build_E_cat(n):
    """(4N, 4N) row placement for layer 1: stacked-tap row i*N+b -> out row b*4+i."""
    e = np.zeros((4 * n, 4 * n), np.float32)
    for i in range(4):
        for b in range(n):
            e[b * 4 + i, i * n + b] = 1.0
    return e


def _build_L_cat(n, h_in):
    """[L_0 L_1 L_2 L_3] : (N*2H, 4*N*H) row scatter (block-diagonal over batch)."""
    h_out = 2 * h_in
    blocks = []
    for (r, p, _ky) in _TAPS_ROW:
        l = np.zeros((n * h_out, n * h_in), np.float32)
        for b in range(n):
            for ob in range(h_in):
                iy = ob + p - 1
                if 0 <= iy < h_in:
                    l[b * h_out + 2 * ob + r, b * h_in + iy] = 1.0
        blocks.append(l)
    return np.concatenate(blocks, axis=1)


def _build_R_cat(w, w_in, n_cols):
    """[R_0 | R_1 | R_2 | R_3] : (Win*Ci, 4*n_cols) column shift x weight tap.
    w is the PyTorch ConvTranspose2d weight (Ci, Co, 4, 4)."""
    ci, co = w.shape[0], w.shape[1]
    blocks = []
    for (_r, _p, ky) in _TAPS_ROW:
        r_mat = np.zeros((w_in * ci, n_cols), np.float32)
        for obx in range(w_in):
            for s in (0, 1):
                ox = 2 * obx + s
                for q, kx in _TAPS_COL[s]:
                    ix = obx + q - 1
                    if 0 <= ix < w_in:
                        r_mat[ix * ci:(ix + 1) * ci,
                              ox * co:(ox + 1) * co] += w[:, :, ky, kx]
        blocks.append(r_mat)
    return np.concatenate(blocks, axis=1)


def _build_P(w_out, co):
    """Channel-pooling projection: P[a*Co+c, b*Co+c'] = (c == c')."""
    return np.tile(np.eye(co, dtype=np.float32), (w_out, w_out))


def _build_V(vecs, w_out, n_cols):
    """Stack per-channel vectors tiled over spatial column blocks (+ lane pad)."""
    rows = []
    for v in vecs:
        full = np.zeros((n_cols,), np.float32)
        t = np.tile(np.asarray(v, np.float32), w_out)
        full[: t.shape[0]] = t
        rows.append(full)
    return np.stack(rows, axis=0)


# ------------------------------------------------------------------ the kernel

def _make_kernel(n, eps=1e-5):
    m1 = float(n * 4 * 4)      # elements per channel for BN of each layer
    m2 = float(n * 8 * 8)
    m3 = float(n * 16 * 16)

    def _tconv(y, r_cat, l_cat, rows, buf):
        # One wide MXU push (rows, 4*128), then stack the 4 lane-aligned tap
        # blocks onto sublanes of the scratch and do a single L_cat matmul.
        z_all = jnp.dot(y, r_cat, preferred_element_type=jnp.float32)
        for t in range(4):
            buf[pl.ds(t * rows, rows), :] = z_all[:, t * 128:(t + 1) * 128]
        z_stack = buf[pl.ds(0, 4 * rows), :]
        return jnp.dot(l_cat, z_stack, preferred_element_type=jnp.float32)

    def _bn_relu(y, p, v, m, buf):
        # Training-mode BN (batch stats, biased var, affine) + ReLU.
        # Stats for both moments pooled over spatial blocks by ONE matmul.
        buf[0:1, :] = jnp.sum(y, axis=0, keepdims=True)
        buf[1:2, :] = jnp.sum(y * y, axis=0, keepdims=True)
        pooled = jnp.dot(buf[0:2, :], p,
                         preferred_element_type=jnp.float32) * (1.0 / m)
        mean = pooled[0:1, :]
        var = pooled[1:2, :] - mean * mean
        scale = v[0:1, :] * jax.lax.rsqrt(var + eps)
        return jnp.maximum((y - mean) * scale + v[1:2, :], 0.0)

    def kernel(x_ref, w1c_ref, e_ref, v1_ref, p1_ref,
               l2_ref, r2c_ref, v2_ref, p2_ref,
               l3_ref, r3c_ref, v3_ref, p3_ref,
               l4_ref, r4c_ref, v4_ref, o_ref, buf_ref):
        x = x_ref[...]                                                # (N, Z)
        # ---- input block: tconv(k4,s1,p0) 1x1 -> 4x4, BN, ReLU
        y = _tconv(x, w1c_ref[...], e_ref[...], n, buf_ref)           # (4N, 128)
        y = _bn_relu(y, p1_ref[...], v1_ref[...], m1, buf_ref)
        # ---- hidden tconv 1: 4x4 -> 8x8, BN, ReLU
        y = _tconv(y, r2c_ref[...], l2_ref[...], 4 * n, buf_ref)      # (8N, 128)
        y = _bn_relu(y, p2_ref[...], v2_ref[...], m2, buf_ref)
        # ---- hidden tconv 2: 8x8 -> 16x16, BN, ReLU
        y = _tconv(y, r3c_ref[...], l3_ref[...], 8 * n, buf_ref)      # (16N, 128)
        y = _bn_relu(y, p3_ref[...], v3_ref[...], m3, buf_ref)
        # ---- output tconv: 16x16 -> 32x32, bias, tanh (lane-padded to 128)
        y = _tconv(y, r4c_ref[...], l4_ref[...], 16 * n, buf_ref)     # (32N, 128)
        o_ref[...] = jnp.tanh(y + v4_ref[...])

    return kernel


# ------------------------------------------------------------------ generator

def init_params(key, z, fs):
    ks = jax.random.split(key, 14)
    n = lambda k, s: 0.1 * jax.random.normal(k, s, dtype=jnp.float32)
    return {
        "w1": n(ks[0], (z, fs[0], 4, 4)), "b1": n(ks[1], (fs[0],)),
        "g1": 1.0 + n(ks[2], (fs[0],)), "be1": n(ks[3], (fs[0],)),
        "w2": n(ks[4], (fs[0], fs[1], 4, 4)), "b2": n(ks[5], (fs[1],)),
        "g2": 1.0 + n(ks[6], (fs[1],)), "be2": n(ks[7], (fs[1],)),
        "w3": n(ks[8], (fs[1], fs[2], 4, 4)), "b3": n(ks[9], (fs[2],)),
        "g3": 1.0 + n(ks[10], (fs[2],)), "be3": n(ks[11], (fs[2],)),
        "w4": n(ks[12], (fs[2], 3, 4, 4)), "b4": n(ks[13], (3,)),
    }


def build_generator(params, n, z, fs):
    """Precompute all constant matrices (setup glue) and return a jitted forward."""
    f0, f1, f2 = fs
    # Lane-dense column blocks (W*C == 128 at every layer for these filter sizes).
    assert 4 * f0 == 128 and 8 * f1 == 128 and 16 * f2 == 128

    w1 = np.asarray(params["w1"]); w2 = np.asarray(params["w2"])
    w3 = np.asarray(params["w3"]); w4 = np.asarray(params["w4"])

    out_cols_valid = 32 * 3                                   # 32 cols x 3 channels
    out_cols = 128                                            # lane-dense output

    # Conv bias is dropped for BN layers (cancels exactly inside batch-norm).
    consts = [
        _build_W1_cat(w1), _build_E_cat(n),
        _build_V([params["g1"], params["be1"]], 4, 128), _build_P(4, f0),
        _build_L_cat(n, 4), _build_R_cat(w2, 4, 128),
        _build_V([params["g2"], params["be2"]], 8, 128), _build_P(8, f1),
        _build_L_cat(n, 8), _build_R_cat(w3, 8, 128),
        _build_V([params["g3"], params["be3"]], 16, 128), _build_P(16, f2),
        _build_L_cat(n, 16), _build_R_cat(w4, 16, out_cols),
        _build_V([params["b4"]], 32, out_cols),
    ]
    consts = [jnp.asarray(c) for c in consts]

    kernel = _make_kernel(n)
    out_rows = n * 32

    def forward(x_nchw):
        x2 = x_nchw.reshape(n, z).astype(jnp.float32)
        args = (x2, *consts)
        out = pl.pallas_call(
            kernel,
            out_shape=jax.ShapeDtypeStruct((out_rows, out_cols), jnp.float32),
            grid=(1,),
            in_specs=[pl.BlockSpec(a.shape, lambda i, nd=a.ndim: (0,) * nd)
                      for a in args],
            out_specs=pl.BlockSpec((out_rows, out_cols), lambda i: (0, 0)),
            scratch_shapes=[pltpu.VMEM((128, 128), jnp.float32)],
            compiler_params=pltpu.CompilerParams(
                dimension_semantics=("arbitrary",)),
        )(*args)
        # (N*32, 128) -> slice lane padding, back to NCHW (layout plumbing only).
        y = out[:, :out_cols_valid].reshape(n, 32, 32, 3)
        return jnp.transpose(y, (0, 3, 1, 2))

    return jax.jit(forward)


# ------------------------------------------------------------------ reference

def _ref_tconv(x, w, b, stride, pad):
    # x: NCHW, w: (Ci, Co, k, k)  (PyTorch ConvTranspose2d layout)
    k = w.shape[2]
    w_oihw = jnp.transpose(w[:, :, ::-1, ::-1], (1, 0, 2, 3))
    y = jax.lax.conv_general_dilated(
        x, w_oihw, window_strides=(1, 1),
        padding=[(k - 1 - pad, k - 1 - pad)] * 2,
        lhs_dilation=(stride, stride),
        dimension_numbers=("NCHW", "OIHW", "NCHW"))
    return y + b.reshape(1, -1, 1, 1)


def _ref_bn_relu(x, g, be, eps=1e-5):
    m = x.mean(axis=(0, 2, 3), keepdims=True)
    v = ((x - m) ** 2).mean(axis=(0, 2, 3), keepdims=True)
    y = (x - m) / jnp.sqrt(v + eps) * g.reshape(1, -1, 1, 1) + be.reshape(1, -1, 1, 1)
    return jnp.maximum(y, 0.0)


def reference_forward(x, p):
    y = _ref_bn_relu(_ref_tconv(x, p["w1"], p["b1"], 1, 0), p["g1"], p["be1"])
    y = _ref_bn_relu(_ref_tconv(y, p["w2"], p["b2"], 2, 1), p["g2"], p["be2"])
    y = _ref_bn_relu(_ref_tconv(y, p["w3"], p["b3"], 2, 1), p["g3"], p["be3"])
    return jnp.tanh(_ref_tconv(y, p["w4"], p["b4"], 2, 1))


# ------------------------------------------------------------------ main

if __name__ == "__main__":
    batch = 2
    latent = 16
    filter_sizes = [32, 16, 8]

    key = jax.random.PRNGKey(0)
    k_x, k_p = jax.random.split(key)
    x = jax.random.normal(k_x, (batch, latent, 1, 1), dtype=jnp.float32)  # NCHW latent

    params = init_params(k_p, latent, filter_sizes)
    forward = build_generator(params, batch, latent, filter_sizes)

    out = jax.block_until_ready(forward(x))
    assert out.shape == (batch, 3, 32, 32), out.shape

    ref = jax.block_until_ready(reference_forward(x, params))
    np.testing.assert_allclose(np.asarray(out), np.asarray(ref), rtol=2e-3, atol=2e-3)

    print("KERNEL_OK")
</pallas_src>

<mosaic_0001>
module attributes {stable_mosaic.version = 11 : i64} {
  func.func @kernel(%arg0: i32, %arg1: memref<2x16xf32, #tpu.memory_space<vmem>>, %arg2: memref<16x512xf32, #tpu.memory_space<vmem>>, %arg3: memref<8x8xf32, #tpu.memory_space<vmem>>, %arg4: memref<2x128xf32, #tpu.memory_space<vmem>>, %arg5: memref<128x128xf32, #tpu.memory_space<vmem>>, %arg6: memref<16x32xf32, #tpu.memory_space<vmem>>, %arg7: memref<128x512xf32, #tpu.memory_space<vmem>>, %arg8: memref<2x128xf32, #tpu.memory_space<vmem>>, %arg9: memref<128x128xf32, #tpu.memory_space<vmem>>, %arg10: memref<32x64xf32, #tpu.memory_space<vmem>>, %arg11: memref<128x512xf32, #tpu.memory_space<vmem>>, %arg12: memref<2x128xf32, #tpu.memory_space<vmem>>, %arg13: memref<128x128xf32, #tpu.memory_space<vmem>>, %arg14: memref<64x128xf32, #tpu.memory_space<vmem>>, %arg15: memref<128x512xf32, #tpu.memory_space<vmem>>, %arg16: memref<1x128xf32, #tpu.memory_space<vmem>>, %arg17: memref<64x128xf32, #tpu.memory_space<vmem>>, %arg18: memref<128x128xf32, #tpu.memory_space<vmem>>) attributes {dimension_semantics = [#tpu.dimension_semantics<arbitrary>], iteration_bounds = array<i64: 1>, scalar_prefetch = 0 : i64, scratch_operands = 1 : i64, tpu.core_type = #tpu.core_type<tc>, window_params = [{pipeline_mode = #tpu.pipeline_mode<synchronous>, transform_indices = @transform_0, window_bounds = array<i64: 2, 16>}, {pipeline_mode = #tpu.pipeline_mode<synchronous>, transform_indices = @transform_1, window_bounds = array<i64: 16, 512>}, {pipeline_mode = #tpu.pipeline_mode<synchronous>, transform_indices = @transform_2, window_bounds = array<i64: 8, 8>}, {pipeline_mode = #tpu.pipeline_mode<synchronous>, transform_indices = @transform_3, window_bounds = array<i64: 2, 128>}, {pipeline_mode = #tpu.pipeline_mode<synchronous>, transform_indices = @transform_4, window_bounds = array<i64: 128, 128>}, {pipeline_mode = #tpu.pipeline_mode<synchronous>, transform_indices = @transform_5, window_bounds = array<i64: 16, 32>}, {pipeline_mode = #tpu.pipeline_mode<synchronous>, transform_indices = @transform_6, window_bounds = array<i64: 128, 512>}, {pipeline_mode = #tpu.pipeline_mode<synchronous>, transform_indices = @transform_7, window_bounds = array<i64: 2, 128>}, {pipeline_mode = #tpu.pipeline_mode<synchronous>, transform_indices = @transform_8, window_bounds = array<i64: 128, 128>}, {pipeline_mode = #tpu.pipeline_mode<synchronous>, transform_indices = @transform_9, window_bounds = array<i64: 32, 64>}, {pipeline_mode = #tpu.pipeline_mode<synchronous>, transform_indices = @transform_10, window_bounds = array<i64: 128, 512>}, {pipeline_mode = #tpu.pipeline_mode<synchronous>, transform_indices = @transform_11, window_bounds = array<i64: 2, 128>}, {pipeline_mode = #tpu.pipeline_mode<synchronous>, transform_indices = @transform_12, window_bounds = array<i64: 128, 128>}, {pipeline_mode = #tpu.pipeline_mode<synchronous>, transform_indices = @transform_13, window_bounds = array<i64: 64, 128>}, {pipeline_mode = #tpu.pipeline_mode<synchronous>, transform_indices = @transform_14, window_bounds = array<i64: 128, 512>}, {pipeline_mode = #tpu.pipeline_mode<synchronous>, transform_indices = @transform_15, window_bounds = array<i64: 1, 128>}, {pipeline_mode = #tpu.pipeline_mode<synchronous>, transform_indices = @transform_16, window_bounds = array<i64: 64, 128>}]} {
    %c0 = arith.constant 0 : index
    %c0_0 = arith.constant 0 : index
    %0 = vector.load %arg1[%c0, %c0_0] : memref<2x16xf32, #tpu.memory_space<vmem>>, vector<2x16xf32>
    %c0_1 = arith.constant 0 : index
    %c0_2 = arith.constant 0 : index
    %1 = vector.load %arg2[%c0_1, %c0_2] : memref<16x512xf32, #tpu.memory_space<vmem>>, vector<16x512xf32>
    %c0_3 = arith.constant 0 : index
    %c0_4 = arith.constant 0 : index
    %2 = vector.load %arg3[%c0_3, %c0_4] : memref<8x8xf32, #tpu.memory_space<vmem>>, vector<8x8xf32>
    %cst = arith.constant dense<0.000000e+00> : vector<2x512xf32>
    %3 = tpu.matmul %0, %1, %cst {dimension_numbers = #tpu.dot_dimension_numbers<[1], [0], [0], [1], [0, 0, 1, 1], [], []>} : vector<2x16xf32>, vector<16x512xf32>, vector<2x512xf32> -> vector<2x512xf32>
    %4 = vector.extract_strided_slice %3 {offsets = [0, 0], sizes = [2, 128], strides = [1, 1]} : vector<2x512xf32> to vector<2x128xf32>
    %c0_5 = arith.constant 0 : index
    %c0_6 = arith.constant 0 : index
    %5 = vector.load %arg18[%c0_5, %c0_6] : memref<128x128xf32, #tpu.memory_space<vmem>>, vector<2x128xf32>
    tpu.vector_store %arg18[%c0_5, %c0_6], %4 {strides = array<i32>} : memref<128x128xf32, #tpu.memory_space<vmem>>, vector<2x128xf32>,
    %6 = vector.extract_strided_slice %3 {offsets = [0, 128], sizes = [2, 128], strides = [1, 1]} : vector<2x512xf32> to vector<2x128xf32>
    %c2 = arith.constant 2 : index
    %c0_7 = arith.constant 0 : index
    %7 = vector.load %arg18[%c2, %c0_7] : memref<128x128xf32, #tpu.memory_space<vmem>>, vector<2x128xf32>
    tpu.vector_store %arg18[%c2, %c0_7], %6 {strides = array<i32>} : memref<128x128xf32, #tpu.memory_space<vmem>>, vector<2x128xf32>,
    %8 = vector.extract_strided_slice %3 {offsets = [0, 256], sizes = [2, 128], strides = [1, 1]} : vector<2x512xf32> to vector<2x128xf32>
    %c4 = arith.constant 4 : index
    %c0_8 = arith.constant 0 : index
    %9 = vector.load %arg18[%c4, %c0_8] : memref<128x128xf32, #tpu.memory_space<vmem>>, vector<2x128xf32>
    tpu.vector_store %arg18[%c4, %c0_8], %8 {strides = array<i32>} : memref<128x128xf32, #tpu.memory_space<vmem>>, vector<2x128xf32>,
    %10 = vector.extract_strided_slice %3 {offsets = [0, 384], sizes = [2, 128], strides = [1, 1]} : vector<2x512xf32> to vector<2x128xf32>
    %c6 = arith.constant 6 : index
    %c0_9 = arith.constant 0 : index
    %11 = vector.load %arg18[%c6, %c0_9] : memref<128x128xf32, #tpu.memory_space<vmem>>, vector<2x128xf32>
    tpu.vector_store %arg18[%c6, %c0_9], %10 {strides = array<i32>} : memref<128x128xf32, #tpu.memory_space<vmem>>, vector<2x128xf32>,
    %c0_10 = arith.constant 0 : index
    %c0_11 = arith.constant 0 : index
    %12 = vector.load %arg18[%c0_10, %c0_11] : memref<128x128xf32, #tpu.memory_space<vmem>>, vector<8x128xf32>
    %cst_12 = arith.constant dense<0.000000e+00> : vector<8x128xf32>
    %13 = tpu.matmul %2, %12, %cst_12 {dimension_numbers = #tpu.dot_dimension_numbers<[1], [0], [0], [1], [0, 0, 1, 1], [], []>} : vector<8x8xf32>, vector<8x128xf32>, vector<8x128xf32> -> vector<8x128xf32>
    %c0_13 = arith.constant 0 : index
    %c0_14 = arith.constant 0 : index
    %14 = vector.load %arg5[%c0_13, %c0_14] : memref<128x128xf32, #tpu.memory_space<vmem>>, vector<128x128xf32>
    %c0_15 = arith.constant 0 : index
    %c0_16 = arith.constant 0 : index
    %15 = vector.load %arg4[%c0_15, %c0_16] : memref<2x128xf32, #tpu.memory_space<vmem>>, vector<2x128xf32>
    %cst_17 = arith.constant dense<0.000000e+00> : vector<128xf32>
    %16 = vector.multi_reduction <add>, %13, %cst_17 [0] : vector<8x128xf32> to vector<128xf32>
    %17 = vector.shape_cast %16 : vector<128xf32> to vector<1x128xf32>
    %c0_18 = arith.constant 0 : index
    %c0_19 = arith.constant 0 : index
    %18 = vector.load %arg18[%c0_18, %c0_19] : memref<128x128xf32, #tpu.memory_space<vmem>>, vector<1x128xf32>
    tpu.vector_store %arg18[%c0_18, %c0_19], %17 {strides = array<i32>} : memref<128x128xf32, #tpu.memory_space<vmem>>, vector<1x128xf32>,
    %19 = arith.mulf %13, %13 : vector<8x128xf32>
    %cst_20 = arith.constant dense<0.000000e+00> : vector<128xf32>
    %20 = vector.multi_reduction <add>, %19, %cst_20 [0] : vector<8x128xf32> to vector<128xf32>
    %21 = vector.shape_cast %20 : vector<128xf32> to vector<1x128xf32>
    %c1 = arith.constant 1 : index
    %c0_21 = arith.constant 0 : index
    %22 = vector.load %arg18[%c1, %c0_21] : memref<128x128xf32, #tpu.memory_space<vmem>>, vector<1x128xf32>
    tpu.vector_store %arg18[%c1, %c0_21], %21 {strides = array<i32>} : memref<128x128xf32, #tpu.memory_space<vmem>>, vector<1x128xf32>,
    %c0_22 = arith.constant 0 : index
    %c0_23 = arith.constant 0 : index
    %23 = vector.load %arg18[%c0_22, %c0_23] : memref<128x128xf32, #tpu.memory_space<vmem>>, vector<2x128xf32>
    %cst_24 = arith.constant dense<0.000000e+00> : vector<2x128xf32>
    %24 = tpu.matmul %23, %14, %cst_24 {dimension_numbers = #tpu.dot_dimension_numbers<[1], [0], [0], [1], [0, 0, 1, 1], [], []>} : vector<2x128xf32>, vector<128x128xf32>, vector<2x128xf32> -> vector<2x128xf32>
    %cst_25 = arith.constant 3.125000e-02 : f32
    %25 = vector.broadcast %cst_25 : f32 to vector<2x128xf32>
    %26 = arith.mulf %24, %25 : vector<2x128xf32>
    %27 = vector.extract_strided_slice %26 {offsets = [0, 0], sizes = [1, 128], strides = [1, 1]} : vector<2x128xf32> to vector<1x128xf32>
    %28 = vector.extract_strided_slice %26 {offsets = [1, 0], sizes = [1, 128], strides = [1, 1]} : vector<2x128xf32> to vector<1x128xf32>
    %29 = arith.mulf %27, %27 : vector<1x128xf32>
    %30 = arith.subf %28, %29 : vector<1x128xf32>
    %31 = vector.extract_strided_slice %15 {offsets = [0, 0], sizes = [1, 128], strides = [1, 1]} : vector<2x128xf32> to vector<1x128xf32>
    %cst_26 = arith.constant 9.99999974E-6 : f32
    %32 = vector.broadcast %cst_26 : f32 to vector<1x128xf32>
    %33 = arith.addf %30, %32 : vector<1x128xf32>
    %34 = math.rsqrt %33 : vector<1x128xf32>
    %35 = arith.mulf %31, %34 : vector<1x128xf32>
    %36 = vector.broadcast %27 : vector<1x128xf32> to vector<8x128xf32>
    %37 = arith.subf %13, %36 : vector<8x128xf32>
    %38 = vector.broadcast %35 : vector<1x128xf32> to vector<8x128xf32>
    %39 = arith.mulf %37, %38 : vector<8x128xf32>
    %40 = vector.extract_strided_slice %15 {offsets = [1, 0], sizes = [1, 128], strides = [1, 1]} : vector<2x128xf32> to vector<1x128xf32>
    %41 = vector.broadcast %40 : vector<1x128xf32> to vector<8x128xf32>
    %42 = arith.addf %39, %41 : vector<8x128xf32>
    %cst_27 = arith.constant 0.000000e+00 : f32
    %43 = vector.broadcast %cst_27 : f32 to vector<8x128xf32>
    %44 = arith.maximumf %42, %43 : vector<8x128xf32>
    %c0_28 = arith.constant 0 : index
    %c0_29 = arith.constant 0 : index
    %45 = vector.load %arg7[%c0_28, %c0_29] : memref<128x512xf32, #tpu.memory_space<vmem>>, vector<128x512xf32>
    %c0_30 = arith.constant 0 : index
    %c0_31 = arith.constant 0 : index
    %46 = vector.load %arg6[%c0_30, %c0_31] : memref<16x32xf32, #tpu.memory_space<vmem>>, vector<16x32xf32>
    %cst_32 = arith.constant dense<0.000000e+00> : vector<8x512xf32>
    %47 = tpu.matmul %44, %45, %cst_32 {dimension_numbers = #tpu.dot_dimension_numbers<[1], [0], [0], [1], [0, 0, 1, 1], [], []>} : vector<8x128xf32>, vector<128x512xf32>, vector<8x512xf32> -> vector<8x512xf32>
    %48 = vector.extract_strided_slice %47 {offsets = [0, 0], sizes = [8, 128], strides = [1, 1]} : vector<8x512xf32> to vector<8x128xf32>
    %c0_33 = arith.constant 0 : index
    %c0_34 = arith.constant 0 : index
    %49 = vector.load %arg18[%c0_33, %c0_34] : memref<128x128xf32, #tpu.memory_space<vmem>>, vector<8x128xf32>
    tpu.vector_store %arg18[%c0_33, %c0_34], %48 {strides = array<i32>} : memref<128x128xf32, #tpu.memory_space<vmem>>, vector<8x128xf32>,
    %50 = vector.extract_strided_slice %47 {offsets = [0, 128], sizes = [8, 128], strides = [1, 1]} : vector<8x512xf32> to vector<8x128xf32>
    %c8 = arith.constant 8 : index
    %c0_35 = arith.constant 0 : index
    %51 = vector.load %arg18[%c8, %c0_35] : memref<128x128xf32, #tpu.memory_space<vmem>>, vector<8x128xf32>
    tpu.vector_store %arg18[%c8, %c0_35], %50 {strides = array<i32>} : memref<128x128xf32, #tpu.memory_space<vmem>>, vector<8x128xf32>,
    %52 = vector.extract_strided_slice %47 {offsets = [0, 256], sizes = [8, 128], strides = [1, 1]} : vector<8x512xf32> to vector<8x128xf32>
    %c16 = arith.constant 16 : index
    %c0_36 = arith.constant 0 : index
    %53 = vector.load %arg18[%c16, %c0_36] : memref<128x128xf32, #tpu.memory_space<vmem>>, vector<8x128xf32>
    tpu.vector_store %arg18[%c16, %c0_36], %52 {strides = array<i32>} : memref<128x128xf32, #tpu.memory_space<vmem>>, vector<8x128xf32>,
    %54 = vector.extract_strided_slice %47 {offsets = [0, 384], sizes = [8, 128], strides = [1, 1]} : vector<8x512xf32> to vector<8x128xf32>
    %c24 = arith.constant 24 : index
    %c0_37 = arith.constant 0 : index
    %55 = vector.load %arg18[%c24, %c0_37] : memref<128x128xf32, #tpu.memory_space<vmem>>, vector<8x128xf32>
    tpu.vector_store %arg18[%c24, %c0_37], %54 {strides = array<i32>} : memref<128x128xf32, #tpu.memory_space<vmem>>, vector<8x128xf32>,
    %c0_38 = arith.constant 0 : index
    %c0_39 = arith.constant 0 : index
    %56 = vector.load %arg18[%c0_38, %c0_39] : memref<128x128xf32, #tpu.memory_space<vmem>>, vector<32x128xf32>
    %cst_40 = arith.constant dense<0.000000e+00> : vector<16x128xf32>
    %57 = tpu.matmul %46, %56, %cst_40 {dimension_numbers = #tpu.dot_dimension_numbers<[1], [0], [0], [1], [0, 0, 1, 1], [], []>} : vector<16x32xf32>, vector<32x128xf32>, vector<16x128xf32> -> vector<16x128xf32>
    %c0_41 = arith.constant 0 : index
    %c0_42 = arith.constant 0 : index
    %58 = vector.load %arg9[%c0_41, %c0_42] : memref<128x128xf32, #tpu.memory_space<vmem>>, vector<128x128xf32>
    %c0_43 = arith.constant 0 : index
    %c0_44 = arith.constant 0 : index
    %59 = vector.load %arg8[%c0_43, %c0_44] : memref<2x128xf32, #tpu.memory_space<vmem>>, vector<2x128xf32>
    %cst_45 = arith.constant dense<0.000000e+00> : vector<128xf32>
    %60 = vector.multi_reduction <add>, %57, %cst_45 [0] : vector<16x128xf32> to vector<128xf32>
    %61 = vector.shape_cast %60 : vector<128xf32> to vector<1x128xf32>
    %c0_46 = arith.constant 0 : index
    %c0_47 = arith.constant 0 : index
    %62 = vector.load %arg18[%c0_46, %c0_47] : memref<128x128xf32, #tpu.memory_space<vmem>>, vector<1x128xf32>
    tpu.vector_store %arg18[%c0_46, %c0_47], %61 {strides = array<i32>} : memref<128x128xf32, #tpu.memory_space<vmem>>, vector<1x128xf32>,
    %63 = arith.mulf %57, %57 : vector<16x128xf32>
    %cst_48 = arith.constant dense<0.000000e+00> : vector<128xf32>
    %64 = vector.multi_reduction <add>, %63, %cst_48 [0] : vector<16x128xf32> to vector<128xf32>
    %65 = vector.shape_cast %64 : vector<128xf32> to vector<1x128xf32>
    %c1_49 = arith.constant 1 : index
    %c0_50 = arith.constant 0 : index
    %66 = vector.load %arg18[%c1_49, %c0_50] : memref<128x128xf32, #tpu.memory_space<vmem>>, vector<1x128xf32>
    tpu.vector_store %arg18[%c1_49, %c0_50], %65 {strides = array<i32>} : memref<128x128xf32, #tpu.memory_space<vmem>>, vector<1x128xf32>,
    %c0_51 = arith.constant 0 : index
    %c0_52 = arith.constant 0 : index
    %67 = vector.load %arg18[%c0_51, %c0_52] : memref<128x128xf32, #tpu.memory_space<vmem>>, vector<2x128xf32>
    %cst_53 = arith.constant dense<0.000000e+00> : vector<2x128xf32>
    %68 = tpu.matmul %67, %58, %cst_53 {dimension_numbers = #tpu.dot_dimension_numbers<[1], [0], [0], [1], [0, 0, 1, 1], [], []>} : vector<2x128xf32>, vector<128x128xf32>, vector<2x128xf32> -> vector<2x128xf32>
    %cst_54 = arith.constant 7.812500e-03 : f32
    %69 = vector.broadcast %cst_54 : f32 to vector<2x128xf32>
    %70 = arith.mulf %68, %69 : vector<2x128xf32>
    %71 = vector.extract_strided_slice %70 {offsets = [0, 0], sizes = [1, 128], strides = [1, 1]} : vector<2x128xf32> to vector<1x128xf32>
    %72 = vector.extract_strided_slice %70 {offsets = [1, 0], sizes = [1, 128], strides = [1, 1]} : vector<2x128xf32> to vector<1x128xf32>
    %73 = arith.mulf %71, %71 : vector<1x128xf32>
    %74 = arith.subf %72, %73 : vector<1x128xf32>
    %75 = vector.extract_strided_slice %59 {offsets = [0, 0], sizes = [1, 128], strides = [1, 1]} : vector<2x128xf32> to vector<1x128xf32>
    %cst_55 = arith.constant 9.99999974E-6 : f32
    %76 = vector.broadcast %cst_55 : f32 to vector<1x128xf32>
    %77 = arith.addf %74, %76 : vector<1x128xf32>
    %78 = math.rsqrt %77 : vector<1x128xf32>
    %79 = arith.mulf %75, %78 : vector<1x128xf32>
    %80 = vector.broadcast %71 : vector<1x128xf32> to vector<16x128xf32>
    %81 = arith.subf %57, %80 : vector<16x128xf32>
    %82 = vector.broadcast %79 : vector<1x128xf32> to vector<16x128xf32>
    %83 = arith.mulf %81, %82 : vector<16x128xf32>
    %84 = vector.extract_strided_slice %59 {offsets = [1, 0], sizes = [1, 128], strides = [1, 1]} : vector<2x128xf32> to vector<1x128xf32>
    %85 = vector.broadcast %84 : vector<1x128xf32> to vector<16x128xf32>
    %86 = arith.addf %83, %85 : vector<16x128xf32>
    %cst_56 = arith.constant 0.000000e+00 : f32
    %87 = vector.broadcast %cst_56 : f32 to vector<16x128xf32>
    %88 = arith.maximumf %86, %87 : vector<16x128xf32>
    %c0_57 = arith.constant 0 : index
    %c0_58 = arith.constant 0 : index
    %89 = vector.load %arg11[%c0_57, %c0_58] : memref<128x512xf32, #tpu.memory_space<vmem>>, vector<128x512xf32>
    %c0_59 = arith.constant 0 : index
    %c0_60 = arith.constant 0 : index
    %90 = vector.load %arg10[%c0_59, %c0_60] : memref<32x64xf32, #tpu.memory_space<vmem>>, vector<32x64xf32>
    %cst_61 = arith.constant dense<0.000000e+00> : vector<16x512xf32>
    %91 = tpu.matmul %88, %89, %cst_61 {dimension_numbers = #tpu.dot_dimension_numbers<[1], [0], [0], [1], [0, 0, 1, 1], [], []>} : vector<16x128xf32>, vector<128x512xf32>, vector<16x512xf32> -> vector<16x512xf32>
    %92 = vector.extract_strided_slice %91 {offsets = [0, 0], sizes = [16, 128], strides = [1, 1]} : vector<16x512xf32> to vector<16x128xf32>
    %c0_62 = arith.constant 0 : index
    %c0_63 = arith.constant 0 : index
    %93 = vector.load %arg18[%c0_62, %c0_63] : memref<128x128xf32, #tpu.memory_space<vmem>>, vector<16x128xf32>
    tpu.vector_store %arg18[%c0_62, %c0_63], %92 {strides = array<i32>} : memref<128x128xf32, #tpu.memory_space<vmem>>, vector<16x128xf32>,
    %94 = vector.extract_strided_slice %91 {offsets = [0, 128], sizes = [16, 128], strides = [1, 1]} : vector<16x512xf32> to vector<16x128xf32>
    %c16_64 = arith.constant 16 : index
    %c0_65 = arith.constant 0 : index
    %95 = vector.load %arg18[%c16_64, %c0_65] : memref<128x128xf32, #tpu.memory_space<vmem>>, vector<16x128xf32>
    tpu.vector_store %arg18[%c16_64, %c0_65], %94 {strides = array<i32>} : memref<128x128xf32, #tpu.memory_space<vmem>>, vector<16x128xf32>,
    %96 = vector.extract_strided_slice %91 {offsets = [0, 256], sizes = [16, 128], strides = [1, 1]} : vector<16x512xf32> to vector<16x128xf32>
    %c32 = arith.constant 32 : index
    %c0_66 = arith.constant 0 : index
    %97 = vector.load %arg18[%c32, %c0_66] : memref<128x128xf32, #tpu.memory_space<vmem>>, vector<16x128xf32>
    tpu.vector_store %arg18[%c32, %c0_66], %96 {strides = array<i32>} : memref<128x128xf32, #tpu.memory_space<vmem>>, vector<16x128xf32>,
    %98 = vector.extract_strided_slice %91 {offsets = [0, 384], sizes = [16, 128], strides = [1, 1]} : vector<16x512xf32> to vector<16x128xf32>
    %c48 = arith.constant 48 : index
    %c0_67 = arith.constant 0 : index
    %99 = vector.load %arg18[%c48, %c0_67] : memref<128x128xf32, #tpu.memory_space<vmem>>, vector<16x128xf32>
    tpu.vector_store %arg18[%c48, %c0_67], %98 {strides = array<i32>} : memref<128x128xf32, #tpu.memory_space<vmem>>, vector<16x128xf32>,
    %c0_68 = arith.constant 0 : index
    %c0_69 = arith.constant 0 : index
    %100 = vector.load %arg18[%c0_68, %c0_69] : memref<128x128xf32, #tpu.memory_space<vmem>>, vector<64x128xf32>
    %cst_70 = arith.constant dense<0.000000e+00> : vector<32x128xf32>
    %101 = tpu.matmul %90, %100, %cst_70 {dimension_numbers = #tpu.dot_dimension_numbers<[1], [0], [0], [1], [0, 0, 1, 1], [], []>} : vector<32x64xf32>, vector<64x128xf32>, vector<32x128xf32> -> vector<32x128xf32>
    %c0_71 = arith.constant 0 : index
    %c0_72 = arith.constant 0 : index
    %102 = vector.load %arg13[%c0_71, %c0_72] : memref<128x128xf32, #tpu.memory_space<vmem>>, vector<128x128xf32>
    %c0_73 = arith.constant 0 : index
    %c0_74 = arith.constant 0 : index
    %103 = vector.load %arg12[%c0_73, %c0_74] : memref<2x128xf32, #tpu.memory_space<vmem>>, vector<2x128xf32>
    %cst_75 = arith.constant dense<0.000000e+00> : vector<128xf32>
    %104 = vector.multi_reduction <add>, %101, %cst_75 [0] : vector<32x128xf32> to vector<128xf32>
    %105 = vector.shape_cast %104 : vector<128xf32> to vector<1x128xf32>
    %c0_76 = arith.constant 0 : index
    %c0_77 = arith.constant 0 : index
    %106 = vector.load %arg18[%c0_76, %c0_77] : memref<128x128xf32, #tpu.memory_space<vmem>>, vector<1x128xf32>
    tpu.vector_store %arg18[%c0_76, %c0_77], %105 {strides = array<i32>} : memref<128x128xf32, #tpu.memory_space<vmem>>, vector<1x128xf32>,
    %107 = arith.mulf %101, %101 : vector<32x128xf32>
    %cst_78 = arith.constant dense<0.000000e+00> : vector<128xf32>
    %108 = vector.multi_reduction <add>, %107, %cst_78 [0] : vector<32x128xf32> to vector<128xf32>
    %109 = vector.shape_cast %108 : vector<128xf32> to vector<1x128xf32>
    %c1_79 = arith.constant 1 : index
    %c0_80 = arith.constant 0 : index
    %110 = vector.load %arg18[%c1_79, %c0_80] : memref<128x128xf32, #tpu.memory_space<vmem>>, vector<1x128xf32>
    tpu.vector_store %arg18[%c1_79, %c0_80], %109 {strides = array<i32>} : memref<128x128xf32, #tpu.memory_space<vmem>>, vector<1x128xf32>,
    %c0_81 = arith.constant 0 : index
    %c0_82 = arith.constant 0 : index
    %111 = vector.load %arg18[%c0_81, %c0_82] : memref<128x128xf32, #tpu.memory_space<vmem>>, vector<2x128xf32>
    %cst_83 = arith.constant dense<0.000000e+00> : vector<2x128xf32>
    %112 = tpu.matmul %111, %102, %cst_83 {dimension_numbers = #tpu.dot_dimension_numbers<[1], [0], [0], [1], [0, 0, 1, 1], [], []>} : vector<2x128xf32>, vector<128x128xf32>, vector<2x128xf32> -> vector<2x128xf32>
    %cst_84 = arith.constant 0.001953125 : f32
    %113 = vector.broadcast %cst_84 : f32 to vector<2x128xf32>
    %114 = arith.mulf %112, %113 : vector<2x128xf32>
    %115 = vector.extract_strided_slice %114 {offsets = [0, 0], sizes = [1, 128], strides = [1, 1]} : vector<2x128xf32> to vector<1x128xf32>
    %116 = vector.extract_strided_slice %114 {offsets = [1, 0], sizes = [1, 128], strides = [1, 1]} : vector<2x128xf32> to vector<1x128xf32>
    %117 = arith.mulf %115, %115 : vector<1x128xf32>
    %118 = arith.subf %116, %117 : vector<1x128xf32>
    %119 = vector.extract_strided_slice %103 {offsets = [0, 0], sizes = [1, 128], strides = [1, 1]} : vector<2x128xf32> to vector<1x128xf32>
    %cst_85 = arith.constant 9.99999974E-6 : f32
    %120 = vector.broadcast %cst_85 : f32 to vector<1x128xf32>
    %121 = arith.addf %118, %120 : vector<1x128xf32>
    %122 = math.rsqrt %121 : vector<1x128xf32>
    %123 = arith.mulf %119, %122 : vector<1x128xf32>
    %124 = vector.broadcast %115 : vector<1x128xf32> to vector<32x128xf32>
    %125 = arith.subf %101, %124 : vector<32x128xf32>
    %126 = vector.broadcast %123 : vector<1x128xf32> to vector<32x128xf32>
    %127 = arith.mulf %125, %126 : vector<32x128xf32>
    %128 = vector.extract_strided_slice %103 {offsets = [1, 0], sizes = [1, 128], strides = [1, 1]} : vector<2x128xf32> to vector<1x128xf32>
    %129 = vector.broadcast %128 : vector<1x128xf32> to vector<32x128xf32>
    %130 = arith.addf %127, %129 : vector<32x128xf32>
    %cst_86 = arith.constant 0.000000e+00 : f32
    %131 = vector.broadcast %cst_86 : f32 to vector<32x128xf32>
    %132 = arith.maximumf %130, %131 : vector<32x128xf32>
    %c0_87 = arith.constant 0 : index
    %c0_88 = arith.constant 0 : index
    %133 = vector.load %arg15[%c0_87, %c0_88] : memref<128x512xf32, #tpu.memory_space<vmem>>, vector<128x512xf32>
    %c0_89 = arith.constant 0 : index
    %c0_90 = arith.constant 0 : index
    %134 = vector.load %arg14[%c0_89, %c0_90] : memref<64x128xf32, #tpu.memory_space<vmem>>, vector<64x128xf32>
    %cst_91 = arith.constant dense<0.000000e+00> : vector<32x512xf32>
    %135 = tpu.matmul %132, %133, %cst_91 {dimension_numbers = #tpu.dot_dimension_numbers<[1], [0], [0], [1], [0, 0, 1, 1], [], []>} : vector<32x128xf32>, vector<128x512xf32>, vector<32x512xf32> -> vector<32x512xf32>
    %136 = vector.extract_strided_slice %135 {offsets = [0, 0], sizes = [32, 128], strides = [1, 1]} : vector<32x512xf32> to vector<32x128xf32>
    %c0_92 = arith.constant 0 : index
    %c0_93 = arith.constant 0 : index
    %137 = vector.load %arg18[%c0_92, %c0_93] : memref<128x128xf32, #tpu.memory_space<vmem>>, vector<32x128xf32>
    tpu.vector_store %arg18[%c0_92, %c0_93], %136 {strides = array<i32>} : memref<128x128xf32, #tpu.memory_space<vmem>>, vector<32x128xf32>,
    %138 = vector.extract_strided_slice %135 {offsets = [0, 128], sizes = [32, 128], strides = [1, 1]} : vector<32x512xf32> to vector<32x128xf32>
    %c32_94 = arith.constant 32 : index
    %c0_95 = arith.constant 0 : index
    %139 = vector.load %arg18[%c32_94, %c0_95] : memref<128x128xf32, #tpu.memory_space<vmem>>, vector<32x128xf32>
    tpu.vector_store %arg18[%c32_94, %c0_95], %138 {strides = array<i32>} : memref<128x128xf32, #tpu.memory_space<vmem>>, vector<32x128xf32>,
    %140 = vector.extract_strided_slice %135 {offsets = [0, 256], sizes = [32, 128], strides = [1, 1]} : vector<32x512xf32> to vector<32x128xf32>
    %c64 = arith.constant 64 : index
    %c0_96 = arith.constant 0 : index
    %141 = vector.load %arg18[%c64, %c0_96] : memref<128x128xf32, #tpu.memory_space<vmem>>, vector<32x128xf32>
    tpu.vector_store %arg18[%c64, %c0_96], %140 {strides = array<i32>} : memref<128x128xf32, #tpu.memory_space<vmem>>, vector<32x128xf32>,
    %142 = vector.extract_strided_slice %135 {offsets = [0, 384], sizes = [32, 128], strides = [1, 1]} : vector<32x512xf32> to vector<32x128xf32>
    %c96 = arith.constant 96 : index
    %c0_97 = arith.constant 0 : index
    %143 = vector.load %arg18[%c96, %c0_97] : memref<128x128xf32, #tpu.memory_space<vmem>>, vector<32x128xf32>
    tpu.vector_store %arg18[%c96, %c0_97], %142 {strides = array<i32>} : memref<128x128xf32, #tpu.memory_space<vmem>>, vector<32x128xf32>,
    %c0_98 = arith.constant 0 : index
    %c0_99 = arith.constant 0 : index
    %144 = vector.load %arg18[%c0_98, %c0_99] : memref<128x128xf32, #tpu.memory_space<vmem>>, vector<128x128xf32>
    %cst_100 = arith.constant dense<0.000000e+00> : vector<64x128xf32>
    %145 = tpu.matmul %134, %144, %cst_100 {dimension_numbers = #tpu.dot_dimension_numbers<[1], [0], [0], [1], [0, 0, 1, 1], [], []>} : vector<64x128xf32>, vector<128x128xf32>, vector<64x128xf32> -> vector<64x128xf32>
    %c0_101 = arith.constant 0 : index
    %c0_102 = arith.constant 0 : index
    %146 = vector.load %arg16[%c0_101, %c0_102] : memref<1x128xf32, #tpu.memory_space<vmem>>, vector<1x128xf32>
    %147 = vector.broadcast %146 : vector<1x128xf32> to vector<64x128xf32>
    %148 = arith.addf %145, %147 : vector<64x128xf32>
    %149 = math.tanh %148 : vector<64x128xf32>
    %c0_103 = arith.constant 0 : index
    %c0_104 = arith.constant 0 : index
    %150 = vector.load %arg17[%c0_103, %c0_104] : memref<64x128xf32, #tpu.memory_space<vmem>>, vector<64x128xf32>
    tpu.vector_store %arg17[%c0_103, %c0_104], %149 {strides = array<i32>} : memref<64x128xf32, #tpu.memory_space<vmem>>, vector<64x128xf32>,
    return
  }
  func.func @transform_0(%arg0: i32) -> (i32, i32) {
    %c0_i32 = arith.constant 0 : i32
    %c0_i32_0 = arith.constant 0 : i32
    %c0_i32_1 = arith.constant 0 : i32
    return %c0_i32, %c0_i32_0 : i32, i32
  }
  func.func @transform_1(%arg0: i32) -> (i32, i32) {
    %c0_i32 = arith.constant 0 : i32
    %c0_i32_0 = arith.constant 0 : i32
    %c0_i32_1 = arith.constant 0 : i32
    return %c0_i32, %c0_i32_0 : i32, i32
  }
  func.func @transform_2(%arg0: i32) -> (i32, i32) {
    %c0_i32 = arith.constant 0 : i32
    %c0_i32_0 = arith.constant 0 : i32
    %c0_i32_1 = arith.constant 0 : i32
    return %c0_i32, %c0_i32_0 : i32, i32
  }
  func.func @transform_3(%arg0: i32) -> (i32, i32) {
    %c0_i32 = arith.constant 0 : i32
    %c0_i32_0 = arith.constant 0 : i32
    %c0_i32_1 = arith.constant 0 : i32
    return %c0_i32, %c0_i32_0 : i32, i32
  }
  func.func @transform_4(%arg0: i32) -> (i32, i32) {
    %c0_i32 = arith.constant 0 : i32
    %c0_i32_0 = arith.constant 0 : i32
    %c0_i32_1 = arith.constant 0 : i32
    return %c0_i32, %c0_i32_0 : i32, i32
  }
  func.func @transform_5(%arg0: i32) -> (i32, i32) {
    %c0_i32 = arith.constant 0 : i32
    %c0_i32_0 = arith.constant 0 : i32
    %c0_i32_1 = arith.constant 0 : i32
    return %c0_i32, %c0_i32_0 : i32, i32
  }
  func.func @transform_6(%arg0: i32) -> (i32, i32) {
    %c0_i32 = arith.constant 0 : i32
    %c0_i32_0 = arith.constant 0 : i32
    %c0_i32_1 = arith.constant 0 : i32
    return %c0_i32, %c0_i32_0 : i32, i32
  }
  func.func @transform_7(%arg0: i32) -> (i32, i32) {
    %c0_i32 = arith.constant 0 : i32
    %c0_i32_0 = arith.constant 0 : i32
    %c0_i32_1 = arith.constant 0 : i32
    return %c0_i32, %c0_i32_0 : i32, i32
  }
  func.func @transform_8(%arg0: i32) -> (i32, i32) {
    %c0_i32 = arith.constant 0 : i32
    %c0_i32_0 = arith.constant 0 : i32
    %c0_i32_1 = arith.constant 0 : i32
    return %c0_i32, %c0_i32_0 : i32, i32
  }
  func.func @transform_9(%arg0: i32) -> (i32, i32) {
    %c0_i32 = arith.constant 0 : i32
    %c0_i32_0 = arith.constant 0 : i32
    %c0_i32_1 = arith.constant 0 : i32
    return %c0_i32, %c0_i32_0 : i32, i32
  }
  func.func @transform_10(%arg0: i32) -> (i32, i32) {
    %c0_i32 = arith.constant 0 : i32
    %c0_i32_0 = arith.constant 0 : i32
    %c0_i32_1 = arith.constant 0 : i32
    return %c0_i32, %c0_i32_0 : i32, i32
  }
  func.func @transform_11(%arg0: i32) -> (i32, i32) {
    %c0_i32 = arith.constant 0 : i32
    %c0_i32_0 = arith.constant 0 : i32
    %c0_i32_1 = arith.constant 0 : i32
    return %c0_i32, %c0_i32_0 : i32, i32
  }
  func.func @transform_12(%arg0: i32) -> (i32, i32) {
    %c0_i32 = arith.constant 0 : i32
    %c0_i32_0 = arith.constant 0 : i32
    %c0_i32_1 = arith.constant 0 : i32
    return %c0_i32, %c0_i32_0 : i32, i32
  }
  func.func @transform_13(%arg0: i32) -> (i32, i32) {
    %c0_i32 = arith.constant 0 : i32
    %c0_i32_0 = arith.constant 0 : i32
    %c0_i32_1 = arith.constant 0 : i32
    return %c0_i32, %c0_i32_0 : i32, i32
  }
  func.func @transform_14(%arg0: i32) -> (i32, i32) {
    %c0_i32 = arith.constant 0 : i32
    %c0_i32_0 = arith.constant 0 : i32
    %c0_i32_1 = arith.constant 0 : i32
    return %c0_i32, %c0_i32_0 : i32, i32
  }
  func.func @transform_15(%arg0: i32) -> (i32, i32) {
    %c0_i32 = arith.constant 0 : i32
    %c0_i32_0 = arith.constant 0 : i32
    %c0_i32_1 = arith.constant 0 : i32
    return %c0_i32, %c0_i32_0 : i32, i32
  }
  func.func @transform_16(%arg0: i32) -> (i32, i32) {
    %c0_i32 = arith.constant 0 : i32
    %c0_i32_0 = arith.constant 0 : i32
    %c0_i32_1 = arith.constant 0 : i32
    return %c0_i32, %c0_i32_0 : i32, i32
  }
}

</mosaic_0001>

<llo_original>
// kernel: forward.1
$region0: #{forward.1}
  #allocation0 [shape = 'u32[]', space=smem, size = 0x4, offset = 0x4, fixed_abs, tag = 'smem constant byte address 0x4 - core index']
  #allocation1 [shape = 'u32[144,128]{1,0:T(1,128)}', space=vmem, size = 0x12000, scoped, tag = 'internal scratch']
  #allocation2 [shape = 'f32[128,128]{1,0:T(8,128)}', space=vmem, size = 0x10000, scoped, tag = 'scratch operand']
  %s0 = inlined_call_operand.vmem [shape: f32[2,16], index: 0, kind: input, shape index: {}]
  %s1 = inlined_call_operand.hbm [shape: f32[16,512], index: 1, kind: input, shape index: {}]
  %s2 = inlined_call_operand.hbm [shape: f32[8,8], index: 2, kind: input, shape index: {}]
  %s3 = inlined_call_operand.hbm [shape: f32[2,128], index: 3, kind: input, shape index: {}]
  %s4 = inlined_call_operand.hbm [shape: f32[128,128], index: 4, kind: input, shape index: {}]
  %s5 = inlined_call_operand.hbm [shape: f32[16,32], index: 5, kind: input, shape index: {}]
  %s6 = inlined_call_operand.hbm [shape: f32[128,512], index: 6, kind: input, shape index: {}]
  %s7 = inlined_call_operand.hbm [shape: f32[2,128], index: 7, kind: input, shape index: {}]
  %s8 = inlined_call_operand.hbm [shape: f32[128,128], index: 8, kind: input, shape index: {}]
  %s9 = inlined_call_operand.vmem [shape: f32[32,64], index: 9, kind: input, shape index: {}]
  %s10 = inlined_call_operand.hbm [shape: f32[128,512], index: 10, kind: input, shape index: {}]
  %s11 = inlined_call_operand.vmem [shape: f32[2,128], index: 11, kind: input, shape index: {}]
  %s12 = inlined_call_operand.hbm [shape: f32[128,128], index: 12, kind: input, shape index: {}]
  %s13 = inlined_call_operand.hbm [shape: f32[64,128], index: 13, kind: input, shape index: {}]
  %s14 = inlined_call_operand.hbm [shape: f32[128,512], index: 14, kind: input, shape index: {}]
  %s15 = inlined_call_operand.vmem [shape: f32[1,128], index: 15, kind: input, shape index: {}]
  %s16 = inlined_call_operand.vmem [shape: f32[64,128], index: 16, kind: output, shape index: {}]
  %s17 = sld [smem:[#allocation0]]
  $region122: #{forward.1} parent=0
    _
  %s19 = ssub.s32 1, %s17
  %s20 = scalar_select 0, %s19, %s17
  $region1: #{forward.1} parent=0
    #allocation3 [shape = 'u8[32768]{0}', space=vmem, size = 0x8000, scoped, tag = 'input window, operand 1, single buffered']
    #allocation4 [shape = 's32[1]{0}', space=sflag, size = 0x4, scoped, tag = 'scoped memory for forward.1']
    #allocation5 [shape = 'u8[4096]{0}', space=vmem, size = 0x1000, scoped, tag = 'input window, operand 2, single buffered']
    #allocation6 [shape = 's32[1]{0}', space=sflag, size = 0x4, scoped, tag = 'scoped memory for forward.1']
    #allocation7 [shape = 'u8[1024]{0}', space=vmem, size = 0x400, scoped, tag = 'input window, operand 3, single buffered']
    #allocation8 [shape = 'u8[65536]{0}', space=vmem, size = 0x10000, scoped, tag = 'input window, operand 4, single buffered']
    #allocation9 [shape = 's32[1]{0}', space=sflag, size = 0x4, scoped, tag = 'scoped memory for forward.1']
    #allocation10 [shape = 'u8[8192]{0}', space=vmem, size = 0x2000, scoped, tag = 'input window, operand 5, single buffered']
    #allocation11 [shape = 'u8[262144]{0}', space=vmem, size = 0x40000, scoped, tag = 'input window, operand 6, single buffered']
    #allocation12 [shape = 's32[1]{0}', space=sflag, size = 0x4, scoped, tag = 'scoped memory for forward.1']
    #allocation13 [shape = 'u8[1024]{0}', space=vmem, size = 0x400, scoped, tag = 'input window, operand 7, single buffered']
    #allocation14 [shape = 'u8[65536]{0}', space=vmem, size = 0x10000, scoped, tag = 'input window, operand 8, single buffered']
    #allocation15 [shape = 's32[1]{0}', space=sflag, size = 0x4, scoped, tag = 'scoped memory for forward.1']
    #allocation16 [shape = 'u8[262144]{0}', space=vmem, size = 0x40000, scoped, tag = 'input window, operand 10, single buffered']
    #allocation17 [shape = 'u8[65536]{0}', space=vmem, size = 0x10000, scoped, tag = 'input window, operand 12, single buffered']
    #allocation18 [shape = 's32[1]{0}', space=sflag, size = 0x4, scoped, tag = 'scoped memory for forward.1']
    #allocation19 [shape = 'u8[32768]{0}', space=vmem, size = 0x8000, scoped, tag = 'input window, operand 13, single buffered']
    #allocation20 [shape = 'u8[262144]{0}', space=vmem, size = 0x40000, scoped, tag = 'input window, operand 14, single buffered']
    #allocation21 [shape = 's32[1]{0}', space=sflag, size = 0x4, scoped, tag = 'scoped memory for forward.1']
    %21 = vsyncpa [#allocation4], 0
    %22 = vsyncpa [#allocation6], 0
    %23 = vsyncpa [#allocation9], 0
    %24 = vsyncpa [#allocation12], 0
    %25 = vsyncpa [#allocation15], 0
    %26 = vsyncpa [#allocation18], 0
    %27 = vsyncpa [#allocation21], 0
    // Predicated region
    $region2: #{forward.1} parent=1 // pred_check
      _
    $region3: #{forward.1} parent=1 // pred_check_branch
      %29 = sbr.rel (0) target = $region5
    $region4: #{forward.1} parent=1 // pred_region
      _
    $region5: #{forward.1} parent=1 // pred_fallthru
      _
    // Predicated region
    $region6: #{forward.1} parent=1 // pred_check
      _
    $region7: #{forward.1} parent=1 // pred_check_branch
      %31 = sbr.rel (0) target = $region9
    $region8: #{forward.1} parent=1 // pred_region
      %s33 = ssub.s32 1024, 1024
      %34 = vsyncadd [#allocation4], %s33
      %s35 = sshll.u32 [#allocation3], 4
      %s36 = int_to_ptr.vmem [resolvable:$true] %s35
      %41 = dma.hbm_to_vmem [thread:$0]  %s1, 1024, %s36, [#allocation4], 512, 512, 32
    $region9: #{forward.1} parent=1 // pred_fallthru
      _
    // Predicated region
    $region10: #{forward.1} parent=1 // pred_check
      _
    $region11: #{forward.1} parent=1 // pred_check_branch
      %43 = sbr.rel (0) target = $region13
    $region12: #{forward.1} parent=1 // pred_region
      %s45 = ssub.s32 128, 128
      %46 = vsyncadd [#allocation6], %s45
      %s48 = sshll.u32 [#allocation5], 4
      %s49 = int_to_ptr.vmem [resolvable:$true] %s48
      %51 = dma.hbm_to_vmem [thread:$0]  %s2, 128, %s49, [#allocation6]
    $region13: #{forward.1} parent=1 // pred_fallthru
      _
    // Predicated region
    $region14: #{forward.1} parent=1 // pred_check
      _
    $region15: #{forward.1} parent=1 // pred_check_branch
      %53 = sbr.rel (0) target = $region17
    $region16: #{forward.1} parent=1 // pred_region
      %s55 = ssub.s32 32, 32
      %56 = vsyncadd [#allocation6], %s55
      %s58 = sshll.u32 [#allocation7], 4
      %s59 = int_to_ptr.vmem [resolvable:$true] %s58
      %61 = dma.hbm_to_vmem [thread:$0]  %s3, 32, %s59, [#allocation6]
    $region17: #{forward.1} parent=1 // pred_fallthru
      _
    // Predicated region
    $region18: #{forward.1} parent=1 // pred_check
      _
    $region19: #{forward.1} parent=1 // pred_check_branch
      %63 = sbr.rel (0) target = $region21
    $region20: #{forward.1} parent=1 // pred_region
      %s65 = ssub.s32 2048, 2048
      %66 = vsyncadd [#allocation9], %s65
      %s67 = sshll.u32 [#allocation8], 4
      %s68 = int_to_ptr.vmem [resolvable:$true] %s67
      %73 = dma.hbm_to_vmem [thread:$0]  %s4, 2048, %s68, [#allocation9], 128, 128, 8
    $region21: #{forward.1} parent=1 // pred_fallthru
      _
    // Predicated region
    $region22: #{forward.1} parent=1 // pred_check
      _
    $region23: #{forward.1} parent=1 // pred_check_branch
      %75 = sbr.rel (0) target = $region25
    $region24: #{forward.1} parent=1 // pred_region
      %s77 = ssub.s32 256, 256
      %78 = vsyncadd [#allocation9], %s77
      %s79 = sshll.u32 [#allocation10], 4
      %s80 = int_to_ptr.vmem [resolvable:$true] %s79
      %85 = dma.hbm_to_vmem [thread:$0]  %s5, 256, %s80, [#allocation9], 128, 128, 8
    $region25: #{forward.1} parent=1 // pred_fallthru
      _
    // Predicated region
    $region26: #{forward.1} parent=1 // pred_check
      _
    $region27: #{forward.1} parent=1 // pred_check_branch
      %87 = sbr.rel (0) target = $region29
    $region28: #{forward.1} parent=1 // pred_region
      %s89 = ssub.s32 8192, 8192
      %90 = vsyncadd [#allocation12], %s89
      %s91 = sshll.u32 [#allocation11], 4
      %s92 = int_to_ptr.vmem [resolvable:$true] %s91
      %97 = dma.hbm_to_vmem [thread:$0]  %s6, 8192, %s92, [#allocation12], 512, 512, 32
    $region29: #{forward.1} parent=1 // pred_fallthru
      _
    // Predicated region
    $region30: #{forward.1} parent=1 // pred_check
      _
    $region31: #{forward.1} parent=1 // pred_check_branch
      %99 = sbr.rel (0) target = $region33
    $region32: #{forward.1} parent=1 // pred_region
      %s101 = ssub.s32 32, 32
      %102 = vsyncadd [#allocation12], %s101
      %s104 = sshll.u32 [#allocation13], 4
      %s105 = int_to_ptr.vmem [resolvable:$true] %s104
      %107 = dma.hbm_to_vmem [thread:$0]  %s7, 32, %s105, [#allocation12]
    $region33: #{forward.1} parent=1 // pred_fallthru
      _
    // Predicated region
    $region34: #{forward.1} parent=1 // pred_check
      _
    $region35: #{forward.1} parent=1 // pred_check_branch
      %109 = sbr.rel (0) target = $region37
    $region36: #{forward.1} parent=1 // pred_region
      %s111 = ssub.s32 2048, 2048
      %112 = vsyncadd [#allocation15], %s111
      %s113 = sshll.u32 [#allocation14], 4
      %s114 = int_to_ptr.vmem [resolvable:$true] %s113
      %119 = dma.hbm_to_vmem [thread:$0]  %s8, 2048, %s114, [#allocation15], 128, 128, 8
    $region37: #{forward.1} parent=1 // pred_fallthru
      _
    // Predicated region
    $region38: #{forward.1} parent=1 // pred_check
      _
    $region39: #{forward.1} parent=1 // pred_check_branch
      %121 = sbr.rel (0) target = $region41
    $region40: #{forward.1} parent=1 // pred_region
      _
    $region41: #{forward.1} parent=1 // pred_fallthru
      _
    // Predicated region
    $region42: #{forward.1} parent=1 // pred_check
      _
    $region43: #{forward.1} parent=1 // pred_check_branch
      %123 = sbr.rel (0) target = $region45
    $region44: #{forward.1} parent=1 // pred_region
      %s125 = ssub.s32 8192, 8192
      %126 = vsyncadd [#allocation15], %s125
      %s127 = sshll.u32 [#allocation16], 4
      %s128 = int_to_ptr.vmem [resolvable:$true] %s127
      %133 = dma.hbm_to_vmem [thread:$0]  %s10, 8192, %s128, [#allocation15], 512, 512, 32
    $region45: #{forward.1} parent=1 // pred_fallthru
      _
    // Predicated region
    $region46: #{forward.1} parent=1 // pred_check
      _
    $region47: #{forward.1} parent=1 // pred_check_branch
      %135 = sbr.rel (0) target = $region49
    $region48: #{forward.1} parent=1 // pred_region
      _
    $region49: #{forward.1} parent=1 // pred_fallthru
      _
    // Predicated region
    $region50: #{forward.1} parent=1 // pred_check
      _
    $region51: #{forward.1} parent=1 // pred_check_branch
      %137 = sbr.rel (0) target = $region53
    $region52: #{forward.1} parent=1 // pred_region
      %s139 = ssub.s32 2048, 2048
      %140 = vsyncadd [#allocation18], %s139
      %s141 = sshll.u32 [#allocation17], 4
      %s142 = int_to_ptr.vmem [resolvable:$true] %s141
      %147 = dma.hbm_to_vmem [thread:$0]  %s12, 2048, %s142, [#allocation18], 128, 128, 8
    $region53: #{forward.1} parent=1 // pred_fallthru
      _
    // Predicated region
    $region54: #{forward.1} parent=1 // pred_check
      _
    $region55: #{forward.1} parent=1 // pred_check_branch
      %149 = sbr.rel (0) target = $region57
    $region56: #{forward.1} parent=1 // pred_region
      %s151 = ssub.s32 1024, 1024
      %152 = vsyncadd [#allocation18], %s151
      %s153 = sshll.u32 [#allocation19], 4
      %s154 = int_to_ptr.vmem [resolvable:$true] %s153
      %159 = dma.hbm_to_vmem [thread:$0]  %s13, 1024, %s154, [#allocation18], 128, 128, 8
    $region57: #{forward.1} parent=1 // pred_fallthru
      _
    // Predicated region
    $region58: #{forward.1} parent=1 // pred_check
      _
    $region59: #{forward.1} parent=1 // pred_check_branch
      %161 = sbr.rel (0) target = $region61
    $region60: #{forward.1} parent=1 // pred_region
      %s163 = ssub.s32 8192, 8192
      %164 = vsyncadd [#allocation21], %s163
      %s165 = sshll.u32 [#allocation20], 4
      %s166 = int_to_ptr.vmem [resolvable:$true] %s165
      %171 = dma.hbm_to_vmem [thread:$0]  %s14, 8192, %s166, [#allocation21], 512, 512, 32
    $region61: #{forward.1} parent=1 // pred_fallthru
      _
    // Predicated region
    $region62: #{forward.1} parent=1 // pred_check
      _
    $region63: #{forward.1} parent=1 // pred_check_branch
      %173 = sbr.rel (0) target = $region65
    $region64: #{forward.1} parent=1 // pred_region
      _
    $region65: #{forward.1} parent=1 // pred_fallthru
      _
    // Predicated region
    $region66: #{forward.1} parent=1 // pred_check
      _
    $region67: #{forward.1} parent=1 // pred_check_branch
      %175 = sbr.rel (0) target = $region69
    $region68: #{forward.1} parent=1 // pred_region
      %176 = dma.done [#allocation4], 1024
    $region69: #{forward.1} parent=1 // pred_fallthru
      _
    // Predicated region
    $region70: #{forward.1} parent=1 // pred_check
      _
    $region71: #{forward.1} parent=1 // pred_check_branch
      %178 = sbr.rel (0) target = $region73
    $region72: #{forward.1} parent=1 // pred_region
      %179 = dma.done [#allocation6], 128
    $region73: #{forward.1} parent=1 // pred_fallthru
      _
    // Predicated region
    $region74: #{forward.1} parent=1 // pred_check
      _
    $region75: #{forward.1} parent=1 // pred_check_branch
      %181 = sbr.rel (0) target = $region77
    $region76: #{forward.1} parent=1 // pred_region
      %182 = dma.done [#allocation6], 32
    $region77: #{forward.1} parent=1 // pred_fallthru
      _
    // Predicated region
    $region78: #{forward.1} parent=1 // pred_check
      _
    $region79: #{forward.1} parent=1 // pred_check_branch
      %184 = sbr.rel (0) target = $region81
    $region80: #{forward.1} parent=1 // pred_region
      %185 = dma.done [#allocation9], 2048
    $region81: #{forward.1} parent=1 // pred_fallthru
      _
    // Predicated region
    $region82: #{forward.1} parent=1 // pred_check
      _
    $region83: #{forward.1} parent=1 // pred_check_branch
      %187 = sbr.rel (0) target = $region85
    $region84: #{forward.1} parent=1 // pred_region
      %188 = dma.done [#allocation9], 256
    $region85: #{forward.1} parent=1 // pred_fallthru
      _
    // Predicated region
    $region86: #{forward.1} parent=1 // pred_check
      _
    $region87: #{forward.1} parent=1 // pred_check_branch
      %190 = sbr.rel (0) target = $region89
    $region88: #{forward.1} parent=1 // pred_region
      %191 = dma.done [#allocation12], 8192
    $region89: #{forward.1} parent=1 // pred_fallthru
      _
    // Predicated region
    $region90: #{forward.1} parent=1 // pred_check
      _
    $region91: #{forward.1} parent=1 // pred_check_branch
      %193 = sbr.rel (0) target = $region93
    $region92: #{forward.1} parent=1 // pred_region
      %194 = dma.done [#allocation12], 32
    $region93: #{forward.1} parent=1 // pred_fallthru
      _
    // Predicated region
    $region94: #{forward.1} parent=1 // pred_check
      _
    $region95: #{forward.1} parent=1 // pred_check_branch
      %196 = sbr.rel (0) target = $region97
    $region96: #{forward.1} parent=1 // pred_region
      %197 = dma.done [#allocation15], 2048
    $region97: #{forward.1} parent=1 // pred_fallthru
      _
    // Predicated region
    $region98: #{forward.1} parent=1 // pred_check
      _
    $region99: #{forward.1} parent=1 // pred_check_branch
      %199 = sbr.rel (0) target = $region101
    $region100: #{forward.1} parent=1 // pred_region
      %200 = dma.done [#allocation15], 8192
    $region101: #{forward.1} parent=1 // pred_fallthru
      _
    // Predicated region
    $region102: #{forward.1} parent=1 // pred_check
      _
    $region103: #{forward.1} parent=1 // pred_check_branch
      %202 = sbr.rel (0) target = $region105
    $region104: #{forward.1} parent=1 // pred_region
      %203 = dma.done [#allocation18], 2048
    $region105: #{forward.1} parent=1 // pred_fallthru
      _
    // Predicated region
    $region106: #{forward.1} parent=1 // pred_check
      _
    $region107: #{forward.1} parent=1 // pred_check_branch
      %205 = sbr.rel (0) target = $region109
    $region108: #{forward.1} parent=1 // pred_region
      %206 = dma.done [#allocation18], 1024
    $region109: #{forward.1} parent=1 // pred_fallthru
      _
    // Predicated region
    $region110: #{forward.1} parent=1 // pred_check
      _
    $region111: #{forward.1} parent=1 // pred_check_branch
      %208 = sbr.rel (0) target = $region113
    $region112: #{forward.1} parent=1 // pred_region
      %209 = dma.done [#allocation21], 8192
    $region113: #{forward.1} parent=1 // pred_fallthru
      _
    %v210 = vld [vmem:[%s0] sm:$0x3]
    %v211 = vld [vmem:[#allocation3] sm:$0xff]
    %v212 = vld [vmem:[#allocation3 + $0x8] sm:$0xff]
    %v213 = vld [vmem:[#allocation3 + $0x10] sm:$0xff]
    %v214 = vld [vmem:[#allocation3 + $0x18] sm:$0xff]
    %v215 = vld [vmem:[#allocation3 + $0x20] sm:$0xff]
    %v216 = vld [vmem:[#allocation3 + $0x28] sm:$0xff]
    %v217 = vld [vmem:[#allocation3 + $0x30] sm:$0xff]
    %v218 = vld [vmem:[#allocation3 + $0x38] sm:$0xff]
    %v219 = vld [vmem:[#allocation5] sm:$0xff]
    %vm220 = vcmask 130048
    %v222 = vsel %vm220, %v210, 0
    %224 = vmatprep.subr.mxu0 %v212
    %225 = vmatpush1.msra.mxu0 %v211
    %226 = vmatprep.subr.mxu0 %v216
    %227 = vmatpush1.msra.mxu0 %v215
    %228 = vmatprep.subr.mxu0 0.0
    %229 = vmatpush1.msra.mxu0 0.0
    %230 = vmatprep.subr.mxu0 0.0
    %231 = vmatpush1.msra.mxu0 0.0
    %232 = vmatprep.subr.mxu0 0.0
    %233 = vmatpush1.msra.mxu0 0.0
    %234 = vmatprep.subr.mxu0 0.0
    %235 = vmatpush1.msra.mxu0 0.0
    %236 = vmatprep.subr.mxu0 0.0
    %237 = vmatpush1.msra.mxu0 0.0
    %238 = vmatprep.subr.mxu0 0.0
    %239 = vmatpush1.msra.mxu0 0.0
    %240 = vmatprep.subr.mxu0 0.0
    %241 = vmatpush1.msra.mxu0 0.0
    %242 = vmatprep.subr.mxu0 0.0
    %243 = vmatpush1.msra.mxu0 0.0
    %244 = vmatprep.subr.mxu0 0.0
    %245 = vmatpush1.msra.mxu0 0.0
    %246 = vmatprep.subr.mxu0 0.0
    %247 = vmatpush1.msra.mxu0 0.0
    %248 = vmatprep.subr.mxu0 0.0
    %249 = vmatpush1.msra.mxu0 0.0
    %250 = vmatprep.subr.mxu0 0.0
    %251 = vmatpush1.msra.mxu0 0.0
    %252 = vmatprep.subr.mxu0 0.0
    %253 = vmatpush1.msra.mxu0 0.0
    %254 = vmatprep.subr.mxu0 0.0
    %255 = vmatpush1.msra.mxu0 0.0
    %256 = vmatprep.subr.mxu0 0.0
    %257 = vmatpush1.msra.mxu0 0.0
    %258 = vmatprep.subr.mxu0 0.0
    %259 = vmatpush1.msra.mxu0 0.0
    %260 = vmatprep.subr.mxu0 0.0
    %261 = vmatpush1.msra.mxu0 0.0
    %262 = vmatprep.subr.mxu0 0.0
    %263 = vmatpush1.msra.mxu0 0.0
    %264 = vmatprep.subr.mxu0 0.0
    %265 = vmatpush1.msra.mxu0 0.0
    %266 = vmatprep.subr.mxu0 0.0
    %267 = vmatpush1.msra.mxu0 0.0
    %268 = vmatprep.subr.mxu0 0.0
    %269 = vmatpush1.msra.mxu0 0.0
    %270 = vmatprep.subr.mxu0 0.0
    %271 = vmatpush1.msra.mxu0 0.0
    %272 = vmatprep.subr.mxu0 0.0
    %273 = vmatpush1.msra.mxu0 0.0
    %274 = vmatprep.subr.mxu0 0.0
    %275 = vmatpush1.msra.mxu0 0.0
    %276 = vmatprep.subr.mxu0 0.0
    %277 = vmatpush1.msra.mxu0 0.0
    %278 = vmatprep.subr.mxu0 0.0
    %279 = vmatpush1.msra.mxu0 0.0
    %280 = vmatprep.subr.mxu0 0.0
    %281 = vmatpush1.msra.mxu0 0.0
    %282 = vmatprep.subr.mxu0 0.0
    %283 = vmatpush1.msra.mxu0 0.0
    %284 = vmatprep.subr.mxu0 0.0
    %285 = vmatpush1.msra.mxu0 0.0
    %286 = vmatprep.subr.mxu0 0.0
    %287 = vmatpush1.msra.mxu0 0.0
    %288 = vmatprep.mubr.f32.mxu0 0.0
    %289 = vmatmul.mubr.f32.gmra.mrb[0].mxu0 %v222
    %v290 = vpop.f32.mrb[0].mxu0
    %v291 = vadd.f32 0.0, %v290
    %v292 = vpop.f32.mrb[0].mxu0
    %v293 = vadd.f32 0.0, %v292
    %294 = vdwg.mxu0
    %295 = vmatprep.subr.mxu0 %v214
    %296 = vmatpush1.msra.mxu0 %v213
    %297 = vmatprep.subr.mxu0 %v218
    %298 = vmatpush1.msra.mxu0 %v217
    %299 = vmatprep.subr.mxu0 0.0
    %300 = vmatpush1.msra.mxu0 0.0
    %301 = vmatprep.subr.mxu0 0.0
    %302 = vmatpush1.msra.mxu0 0.0
    %303 = vmatprep.subr.mxu0 0.0
    %304 = vmatpush1.msra.mxu0 0.0
    %305 = vmatprep.subr.mxu0 0.0
    %306 = vmatpush1.msra.mxu0 0.0
    %307 = vmatprep.subr.mxu0 0.0
    %308 = vmatpush1.msra.mxu0 0.0
    %309 = vmatprep.subr.mxu0 0.0
    %310 = vmatpush1.msra.mxu0 0.0
    %311 = vmatprep.subr.mxu0 0.0
    %312 = vmatpush1.msra.mxu0 0.0
    %313 = vmatprep.subr.mxu0 0.0
    %314 = vmatpush1.msra.mxu0 0.0
    %315 = vmatprep.subr.mxu0 0.0
    %316 = vmatpush1.msra.mxu0 0.0
    %317 = vmatprep.subr.mxu0 0.0
    %318 = vmatpush1.msra.mxu0 0.0
    %319 = vmatprep.subr.mxu0 0.0
    %320 = vmatpush1.msra.mxu0 0.0
    %321 = vmatprep.subr.mxu0 0.0
    %322 = vmatpush1.msra.mxu0 0.0
    %323 = vmatprep.subr.mxu0 0.0
    %324 = vmatpush1.msra.mxu0 0.0
    %325 = vmatprep.subr.mxu0 0.0
    %326 = vmatpush1.msra.mxu0 0.0
    %327 = vmatprep.subr.mxu0 0.0
    %328 = vmatpush1.msra.mxu0 0.0
    %329 = vmatprep.subr.mxu0 0.0
    %330 = vmatpush1.msra.mxu0 0.0
    %331 = vmatprep.subr.mxu0 0.0
    %332 = vmatpush1.msra.mxu0 0.0
    %333 = vmatprep.subr.mxu0 0.0
    %334 = vmatpush1.msra.mxu0 0.0
    %335 = vmatprep.subr.mxu0 0.0
    %336 = vmatpush1.msra.mxu0 0.0
    %337 = vmatprep.subr.mxu0 0.0
    %338 = vmatpush1.msra.mxu0 0.0
    %339 = vmatprep.subr.mxu0 0.0
    %340 = vmatpush1.msra.mxu0 0.0
    %341 = vmatprep.subr.mxu0 0.0
    %342 = vmatpush1.msra.mxu0 0.0
    %343 = vmatprep.subr.mxu0 0.0
    %344 = vmatpush1.msra.mxu0 0.0
    %345 = vmatprep.subr.mxu0 0.0
    %346 = vmatpush1.msra.mxu0 0.0
    %347 = vmatprep.subr.mxu0 0.0
    %348 = vmatpush1.msra.mxu0 0.0
    %349 = vmatprep.subr.mxu0 0.0
    %350 = vmatpush1.msra.mxu0 0.0
    %351 = vmatprep.subr.mxu0 0.0
    %352 = vmatpush1.msra.mxu0 0.0
    %353 = vmatprep.subr.mxu0 0.0
    %354 = vmatpush1.msra.mxu0 0.0
    %355 = vmatprep.subr.mxu0 0.0
    %356 = vmatpush1.msra.mxu0 0.0
    %357 = vmatprep.subr.mxu0 0.0
    %358 = vmatpush1.msra.mxu0 0.0
    %359 = vmatprep.mubr.f32.mxu0 0.0
    %360 = vmatmul.mubr.f32.gmra.mrb[0].mxu0 %v222
    %v361 = vpop.f32.mrb[0].mxu0
    %v362 = vadd.f32 0.0, %v361
    %v363 = vpop.f32.mrb[0].mxu0
    %v364 = vadd.f32 0.0, %v363
    %365 = vdwg.mxu0
    %366 = vst [vmem:[#allocation2] sm:$0x3] %v291
    %367 = vst [vmem:[#allocation2 + $0x2] sm:$0x3] %v293
    %368 = vst [vmem:[#allocation2 + $0x4] sm:$0x3] %v362
    %369 = vst [vmem:[#allocation2 + $0x6] sm:$0x3] %v364
    %v370 = vld [vmem:[#allocation2] sm:$0xff]
    %vm371 = vcmask 64512
    %v373 = vsel %vm371, %v219, 0
    %375 = vmatprep.subr.mxu0 0.0
    %376 = vmatpush1.msra.mxu0 %v370
    %377 = vmatprep.subr.mxu0 0.0
    %378 = vmatpush1.msra.mxu0 0.0
    %379 = vmatprep.subr.mxu0 0.0
    %380 = vmatpush1.msra.mxu0 0.0
    %381 = vmatprep.subr.mxu0 0.0
    %382 = vmatpush1.msra.mxu0 0.0
    %383 = vmatprep.subr.mxu0 0.0
    %384 = vmatpush1.msra.mxu0 0.0
    %385 = vmatprep.subr.mxu0 0.0
    %386 = vmatpush1.msra.mxu0 0.0
    %387 = vmatprep.subr.mxu0 0.0
    %388 = vmatpush1.msra.mxu0 0.0
    %389 = vmatprep.subr.mxu0 0.0
    %390 = vmatpush1.msra.mxu0 0.0
    %391 = vmatprep.subr.mxu0 0.0
    %392 = vmatpush1.msra.mxu0 0.0
    %393 = vmatprep.subr.mxu0 0.0
    %394 = vmatpush1.msra.mxu0 0.0
    %395 = vmatprep.subr.mxu0 0.0
    %396 = vmatpush1.msra.mxu0 0.0
    %397 = vmatprep.subr.mxu0 0.0
    %398 = vmatpush1.msra.mxu0 0.0
    %399 = vmatprep.subr.mxu0 0.0
    %400 = vmatpush1.msra.mxu0 0.0
    %401 = vmatprep.subr.mxu0 0.0
    %402 = vmatpush1.msra.mxu0 0.0
    %403 = vmatprep.subr.mxu0 0.0
    %404 = vmatpush1.msra.mxu0 0.0
    %405 = vmatprep.subr.mxu0 0.0
    %406 = vmatpush1.msra.mxu0 0.0
    %407 = vmatprep.subr.mxu0 0.0
    %408 = vmatpush1.msra.mxu0 0.0
    %409 = vmatprep.subr.mxu0 0.0
    %410 = vmatpush1.msra.mxu0 0.0
    %411 = vmatprep.subr.mxu0 0.0
    %412 = vmatpush1.msra.mxu0 0.0
    %413 = vmatprep.subr.mxu0 0.0
    %414 = vmatpush1.msra.mxu0 0.0
    %415 = vmatprep.subr.mxu0 0.0
    %416 = vmatpush1.msra.mxu0 0.0
    %417 = vmatprep.subr.mxu0 0.0
    %418 = vmatpush1.msra.mxu0 0.0
    %419 = vmatprep.subr.mxu0 0.0
    %420 = vmatpush1.msra.mxu0 0.0
    %421 = vmatprep.subr.mxu0 0.0
    %422 = vmatpush1.msra.mxu0 0.0
    %423 = vmatprep.subr.mxu0 0.0
    %424 = vmatpush1.msra.mxu0 0.0
    %425 = vmatprep.subr.mxu0 0.0
    %426 = vmatpush1.msra.mxu0 0.0
    %427 = vmatprep.subr.mxu0 0.0
    %428 = vmatpush1.msra.mxu0 0.0
    %429 = vmatprep.subr.mxu0 0.0
    %430 = vmatpush1.msra.mxu0 0.0
    %431 = vmatprep.subr.mxu0 0.0
    %432 = vmatpush1.msra.mxu0 0.0
    %433 = vmatprep.subr.mxu0 0.0
    %434 = vmatpush1.msra.mxu0 0.0
    %435 = vmatprep.subr.mxu0 0.0
    %436 = vmatpush1.msra.mxu0 0.0
    %437 = vmatprep.subr.mxu0 0.0
    %438 = vmatpush1.msra.mxu0 0.0
    %439 = vmatprep.mubr.f32.mxu0 0.0
    %440 = vmatmul.mubr.f32.gmra.mrb[0].mxu0 %v373
    %v441 = vpop.f32.mrb[0].mxu0
    %v442 = vadd.f32 0.0, %v441
    %v443 = vpop.f32.mrb[0].mxu0
    %444 = vdwg.mxu0
    %v445 = vld [vmem:[#allocation8] sm:$0xff]
    %v446 = vld [vmem:[#allocation8 + $0x8] sm:$0xff]
    %v447 = vld [vmem:[#allocation8 + $0x10] sm:$0xff]
    %v448 = vld [vmem:[#allocation8 + $0x18] sm:$0xff]
    %v449 = vld [vmem:[#allocation8 + $0x20] sm:$0xff]
    %v450 = vld [vmem:[#allocation8 + $0x28] sm:$0xff]
    %v451 = vld [vmem:[#allocation8 + $0x30] sm:$0xff]
    %v452 = vld [vmem:[#allocation8 + $0x38] sm:$0xff]
    %v453 = vld [vmem:[#allocation8 + $0x40] sm:$0xff]
    %v454 = vld [vmem:[#allocation8 + $0x48] sm:$0xff]
    %v455 = vld [vmem:[#allocation8 + $0x50] sm:$0xff]
    %v456 = vld [vmem:[#allocation8 + $0x58] sm:$0xff]
    %v457 = vld [vmem:[#allocation8 + $0x60] sm:$0xff]
    %v458 = vld [vmem:[#allocation8 + $0x68] sm:$0xff]
    %v459 = vld [vmem:[#allocation8 + $0x70] sm:$0xff]
    %v460 = vld [vmem:[#allocation8 + $0x78] sm:$0xff]
    %v461 = vld [vmem:[#allocation7] sm:$0x3]
    %v462 = vrot.slane %v442, 4
    %v463 = vadd.f32 %v442, %v462
    %v464 = vrot.slane %v463, 2
    %v465 = vadd.f32 %v463, %v464
    %v466 = vrot.slane %v465, 1
    %v467 = vadd.f32 %v465, %v466
    %468 = vst [vmem:[#allocation2] sm:$0x1] %v467
    %v469 = vmul.f32 %v442, %v442
    %v470 = vrot.slane %v469, 4
    %v471 = vadd.f32 %v469, %v470
    %v472 = vrot.slane %v471, 2
    %v473 = vadd.f32 %v471, %v472
    %v474 = vrot.slane %v473, 1
    %v475 = vadd.f32 %v473, %v474
    %476 = vst [vmem:[#allocation2 + $0x1] sm:$0x1] %v475
    %v477 = vld [vmem:[#allocation2] sm:$0x3]
    %478 = vmatprep.subr.mxu0 0.0
    %479 = vmatpush1.msra.mxu0 %v445
    %480 = vmatprep.subr.mxu0 0.0
    %481 = vmatpush1.msra.mxu0 %v446
    %482 = vmatprep.subr.mxu0 0.0
    %483 = vmatpush1.msra.mxu0 %v447
    %484 = vmatprep.subr.mxu0 0.0
    %485 = vmatpush1.msra.mxu0 %v448
    %486 = vmatprep.subr.mxu0 0.0
    %487 = vmatpush1.msra.mxu0 %v449
    %488 = vmatprep.subr.mxu0 0.0
    %489 = vmatpush1.msra.mxu0 %v450
    %490 = vmatprep.subr.mxu0 0.0
    %491 = vmatpush1.msra.mxu0 %v451
    %492 = vmatprep.subr.mxu0 0.0
    %493 = vmatpush1.msra.mxu0 %v452
    %494 = vmatprep.subr.mxu0 0.0
    %495 = vmatpush1.msra.mxu0 %v453
    %496 = vmatprep.subr.mxu0 0.0
    %497 = vmatpush1.msra.mxu0 %v454
    %498 = vmatprep.subr.mxu0 0.0
    %499 = vmatpush1.msra.mxu0 %v455
    %500 = vmatprep.subr.mxu0 0.0
    %501 = vmatpush1.msra.mxu0 %v456
    %502 = vmatprep.subr.mxu0 0.0
    %503 = vmatpush1.msra.mxu0 %v457
    %504 = vmatprep.subr.mxu0 0.0
    %505 = vmatpush1.msra.mxu0 %v458
    %506 = vmatprep.subr.mxu0 0.0
    %507 = vmatpush1.msra.mxu0 %v459
    %508 = vmatprep.subr.mxu0 0.0
    %509 = vmatpush1.msra.mxu0 %v460
    %510 = vmatprep.subr.mxu0 0.0
    %511 = vmatpush1.msra.mxu0 0.0
    %512 = vmatprep.subr.mxu0 0.0
    %513 = vmatpush1.msra.mxu0 0.0
    %514 = vmatprep.subr.mxu0 0.0
    %515 = vmatpush1.msra.mxu0 0.0
    %516 = vmatprep.subr.mxu0 0.0
    %517 = vmatpush1.msra.mxu0 0.0
    %518 = vmatprep.subr.mxu0 0.0
    %519 = vmatpush1.msra.mxu0 0.0
    %520 = vmatprep.subr.mxu0 0.0
    %521 = vmatpush1.msra.mxu0 0.0
    %522 = vmatprep.subr.mxu0 0.0
    %523 = vmatpush1.msra.mxu0 0.0
    %524 = vmatprep.subr.mxu0 0.0
    %525 = vmatpush1.msra.mxu0 0.0
    %526 = vmatprep.subr.mxu0 0.0
    %527 = vmatpush1.msra.mxu0 0.0
    %528 = vmatprep.subr.mxu0 0.0
    %529 = vmatpush1.msra.mxu0 0.0
    %530 = vmatprep.subr.mxu0 0.0
    %531 = vmatpush1.msra.mxu0 0.0
    %532 = vmatprep.subr.mxu0 0.0
    %533 = vmatpush1.msra.mxu0 0.0
    %534 = vmatprep.subr.mxu0 0.0
    %535 = vmatpush1.msra.mxu0 0.0
    %536 = vmatprep.subr.mxu0 0.0
    %537 = vmatpush1.msra.mxu0 0.0
    %538 = vmatprep.subr.mxu0 0.0
    %539 = vmatpush1.msra.mxu0 0.0
    %540 = vmatprep.subr.mxu0 0.0
    %541 = vmatpush1.msra.mxu0 0.0
    %542 = vmatprep.mubr.f32.mxu0 0.0
    %543 = vmatmul.mubr.f32.gmra.mrb[0].mxu0 %v477
    %v544 = vpop.f32.mrb[0].mxu0
    %v545 = vadd.f32 0.0, %v544
    %v546 = vpop.f32.mrb[0].mxu0
    %547 = vdwg.mxu0
    %v548 = vmul.f32 %v545, 0.03125
    %v549 = vmul.f32 %v548, %v548
    %v551 = vrot.slane %v549, 7
    %v553 = vsub.f32 %v548, %v551
    %v554 = vadd.f32 %v553, 1e-05
    %v555 = vrsqrt.pop %v554
    %v557 = vrot.slane %v555, 1
    %v559 = vmul.f32 %v461, %v557
    %v560 = vlaneseq
    %v561 = vshrl.u32 %v560, 7
    %v562 = vsub.s32 0, %v561
    %v563 = vrot.slane %v548, %v562
    %v564 = vsub.f32 %v442, %v563
    %v565 = vlaneseq
    %v566 = vshrl.u32 %v565, 7
    %v567 = vsub.s32 0, %v566
    %v568 = vrot.slane %v559, %v567
    %v569 = vmul.f32 %v564, %v568
    %v570 = vlaneseq
    %v571 = vshrl.u32 %v570, 7
    %v572 = vsub.s32 1, %v571
    %v573 = vrot.slane %v461, %v572
    %v574 = vadd.f32 %v569, %v573
    %v575 = vmax.f32 %v574, 0.0
    %v576 = vld [vmem:[#allocation11] sm:$0xff]
    %v577 = vld [vmem:[#allocation11 + $0x8] sm:$0xff]
    %v578 = vld [vmem:[#allocation11 + $0x10] sm:$0xff]
    %v579 = vld [vmem:[#allocation11 + $0x18] sm:$0xff]
    %v580 = vld [vmem:[#allocation11 + $0x20] sm:$0xff]
    %v581 = vld [vmem:[#allocation11 + $0x28] sm:$0xff]
    %v582 = vld [vmem:[#allocation11 + $0x30] sm:$0xff]
    %v583 = vld [vmem:[#allocation11 + $0x38] sm:$0xff]
    %v584 = vld [vmem:[#allocation11 + $0x40] sm:$0xff]
    %v585 = vld [vmem:[#allocation11 + $0x48] sm:$0xff]
    %v586 = vld [vmem:[#allocation11 + $0x50] sm:$0xff]
    %v587 = vld [vmem:[#allocation11 + $0x58] sm:$0xff]
    %v588 = vld [vmem:[#allocation11 + $0x60] sm:$0xff]
    %v589 = vld [vmem:[#allocation11 + $0x68] sm:$0xff]
    %v590 = vld [vmem:[#allocation11 + $0x70] sm:$0xff]
    %v591 = vld [vmem:[#allocation11 + $0x78] sm:$0xff]
    %v592 = vld [vmem:[#allocation11 + $0x80] sm:$0xff]
    %v593 = vld [vmem:[#allocation11 + $0x88] sm:$0xff]
    %v594 = vld [vmem:[#allocation11 + $0x90] sm:$0xff]
    %v595 = vld [vmem:[#allocation11 + $0x98] sm:$0xff]
    %v596 = vld [vmem:[#allocation11 + $0xa0] sm:$0xff]
    %v597 = vld [vmem:[#allocation11 + $0xa8] sm:$0xff]
    %v598 = vld [vmem:[#allocation11 + $0xb0] sm:$0xff]
    %v599 = vld [vmem:[#allocation11 + $0xb8] sm:$0xff]
    %v600 = vld [vmem:[#allocation11 + $0xc0] sm:$0xff]
    %v601 = vld [vmem:[#allocation11 + $0xc8] sm:$0xff]
    %v602 = vld [vmem:[#allocation11 + $0xd0] sm:$0xff]
    %v603 = vld [vmem:[#allocation11 + $0xd8] sm:$0xff]
    %v604 = vld [vmem:[#allocation11 + $0xe0] sm:$0xff]
    %v605 = vld [vmem:[#allocation11 + $0xe8] sm:$0xff]
    %v606 = vld [vmem:[#allocation11 + $0xf0] sm:$0xff]
    %v607 = vld [vmem:[#allocation11 + $0xf8] sm:$0xff]
    %v608 = vld [vmem:[#allocation11 + $0x100] sm:$0xff]
    %v609 = vld [vmem:[#allocation11 + $0x108] sm:$0xff]
    %v610 = vld [vmem:[#allocation11 + $0x110] sm:$0xff]
    %v611 = vld [vmem:[#allocation11 + $0x118] sm:$0xff]
    %v612 = vld [vmem:[#allocation11 + $0x120] sm:$0xff]
    %v613 = vld [vmem:[#allocation11 + $0x128] sm:$0xff]
    %v614 = vld [vmem:[#allocation11 + $0x130] sm:$0xff]
    %v615 = vld [vmem:[#allocation11 + $0x138] sm:$0xff]
    %v616 = vld [vmem:[#allocation11 + $0x140] sm:$0xff]
    %v617 = vld [vmem:[#allocation11 + $0x148] sm:$0xff]
    %v618 = vld [vmem:[#allocation11 + $0x150] sm:$0xff]
    %v619 = vld [vmem:[#allocation11 + $0x158] sm:$0xff]
    %v620 = vld [vmem:[#allocation11 + $0x160] sm:$0xff]
    %v621 = vld [vmem:[#allocation11 + $0x168] sm:$0xff]
    %v622 = vld [vmem:[#allocation11 + $0x170] sm:$0xff]
    %v623 = vld [vmem:[#allocation11 + $0x178] sm:$0xff]
    %v624 = vld [vmem:[#allocation11 + $0x180] sm:$0xff]
    %v625 = vld [vmem:[#allocation11 + $0x188] sm:$0xff]
    %v626 = vld [vmem:[#allocation11 + $0x190] sm:$0xff]
    %v627 = vld [vmem:[#allocation11 + $0x198] sm:$0xff]
    %v628 = vld [vmem:[#allocation11 + $0x1a0] sm:$0xff]
    %v629 = vld [vmem:[#allocation11 + $0x1a8] sm:$0xff]
    %v630 = vld [vmem:[#allocation11 + $0x1b0] sm:$0xff]
    %v631 = vld [vmem:[#allocation11 + $0x1b8] sm:$0xff]
    %v632 = vld [vmem:[#allocation11 + $0x1c0] sm:$0xff]
    %v633 = vld [vmem:[#allocation11 + $0x1c8] sm:$0xff]
    %v634 = vld [vmem:[#allocation11 + $0x1d0] sm:$0xff]
    %v635 = vld [vmem:[#allocation11 + $0x1d8] sm:$0xff]
    %v636 = vld [vmem:[#allocation11 + $0x1e0] sm:$0xff]
    %v637 = vld [vmem:[#allocation11 + $0x1e8] sm:$0xff]
    %v638 = vld [vmem:[#allocation11 + $0x1f0] sm:$0xff]
    %v639 = vld [vmem:[#allocation11 + $0x1f8] sm:$0xff]
    %v640 = vld [vmem:[#allocation10] sm:$0xff]
    %v641 = vld [vmem:[#allocation10 + $0x8] sm:$0xff]
    %642 = vmatprep.subr.mxu0 %v577
    %643 = vmatpush1.msra.mxu0 %v576
    %644 = vmatprep.subr.mxu0 %v581
    %645 = vmatpush1.msra.mxu0 %v580
    %646 = vmatprep.subr.mxu0 %v585
    %647 = vmatpush1.msra.mxu0 %v584
    %648 = vmatprep.subr.mxu0 %v589
    %649 = vmatpush1.msra.mxu0 %v588
    %650 = vmatprep.subr.mxu0 %v593
    %651 = vmatpush1.msra.mxu0 %v592
    %652 = vmatprep.subr.mxu0 %v597
    %653 = vmatpush1.msra.mxu0 %v596
    %654 = vmatprep.subr.mxu0 %v601
    %655 = vmatpush1.msra.mxu0 %v600
    %656 = vmatprep.subr.mxu0 %v605
    %657 = vmatpush1.msra.mxu0 %v604
    %658 = vmatprep.subr.mxu0 %v609
    %659 = vmatpush1.msra.mxu0 %v608
    %660 = vmatprep.subr.mxu0 %v613
    %661 = vmatpush1.msra.mxu0 %v612
    %662 = vmatprep.subr.mxu0 %v617
    %663 = vmatpush1.msra.mxu0 %v616
    %664 = vmatprep.subr.mxu0 %v621
    %665 = vmatpush1.msra.mxu0 %v620
    %666 = vmatprep.subr.mxu0 %v625
    %667 = vmatpush1.msra.mxu0 %v624
    %668 = vmatprep.subr.mxu0 %v629
    %669 = vmatpush1.msra.mxu0 %v628
    %670 = vmatprep.subr.mxu0 %v633
    %671 = vmatpush1.msra.mxu0 %v632
    %672 = vmatprep.subr.mxu0 %v637
    %673 = vmatpush1.msra.mxu0 %v636
    %674 = vmatprep.subr.mxu0 0.0
    %675 = vmatpush1.msra.mxu0 0.0
    %676 = vmatprep.subr.mxu0 0.0
    %677 = vmatpush1.msra.mxu0 0.0
    %678 = vmatprep.subr.mxu0 0.0
    %679 = vmatpush1.msra.mxu0 0.0
    %680 = vmatprep.subr.mxu0 0.0
    %681 = vmatpush1.msra.mxu0 0.0
    %682 = vmatprep.subr.mxu0 0.0
    %683 = vmatpush1.msra.mxu0 0.0
    %684 = vmatprep.subr.mxu0 0.0
    %685 = vmatpush1.msra.mxu0 0.0
    %686 = vmatprep.subr.mxu0 0.0
    %687 = vmatpush1.msra.mxu0 0.0
    %688 = vmatprep.subr.mxu0 0.0
    %689 = vmatpush1.msra.mxu0 0.0
    %690 = vmatprep.subr.mxu0 0.0
    %691 = vmatpush1.msra.mxu0 0.0
    %692 = vmatprep.subr.mxu0 0.0
    %693 = vmatpush1.msra.mxu0 0.0
    %694 = vmatprep.subr.mxu0 0.0
    %695 = vmatpush1.msra.mxu0 0.0
    %696 = vmatprep.subr.mxu0 0.0
    %697 = vmatpush1.msra.mxu0 0.0
    %698 = vmatprep.subr.mxu0 0.0
    %699 = vmatpush1.msra.mxu0 0.0
    %700 = vmatprep.subr.mxu0 0.0
    %701 = vmatpush1.msra.mxu0 0.0
    %702 = vmatprep.subr.mxu0 0.0
    %703 = vmatpush1.msra.mxu0 0.0
    %704 = vmatprep.subr.mxu0 0.0
    %705 = vmatpush1.msra.mxu0 0.0
    %706 = vmatprep.mubr.f32.mxu0 0.0
    %707 = vmatmul.mubr.f32.gmra.mrb[0].mxu0 %v575
    %v708 = vpop.f32.mrb[0].mxu0
    %v709 = vadd.f32 0.0, %v708
    %v710 = vpop.f32.mrb[0].mxu0
    %v711 = vadd.f32 0.0, %v710
    %712 = vdwg.mxu0
    %713 = vmatprep.subr.mxu0 %v579
    %714 = vmatpush1.msra.mxu0 %v578
    %715 = vmatprep.subr.mxu0 %v583
    %716 = vmatpush1.msra.mxu0 %v582
    %717 = vmatprep.subr.mxu0 %v587
    %718 = vmatpush1.msra.mxu0 %v586
    %719 = vmatprep.subr.mxu0 %v591
    %720 = vmatpush1.msra.mxu0 %v590
    %721 = vmatprep.subr.mxu0 %v595
    %722 = vmatpush1.msra.mxu0 %v594
    %723 = vmatprep.subr.mxu0 %v599
    %724 = vmatpush1.msra.mxu0 %v598
    %725 = vmatprep.subr.mxu0 %v603
    %726 = vmatpush1.msra.mxu0 %v602
    %727 = vmatprep.subr.mxu0 %v607
    %728 = vmatpush1.msra.mxu0 %v606
    %729 = vmatprep.subr.mxu0 %v611
    %730 = vmatpush1.msra.mxu0 %v610
    %731 = vmatprep.subr.mxu0 %v615
    %732 = vmatpush1.msra.mxu0 %v614
    %733 = vmatprep.subr.mxu0 %v619
    %734 = vmatpush1.msra.mxu0 %v618
    %735 = vmatprep.subr.mxu0 %v623
    %736 = vmatpush1.msra.mxu0 %v622
    %737 = vmatprep.subr.mxu0 %v627
    %738 = vmatpush1.msra.mxu0 %v626
    %739 = vmatprep.subr.mxu0 %v631
    %740 = vmatpush1.msra.mxu0 %v630
    %741 = vmatprep.subr.mxu0 %v635
    %742 = vmatpush1.msra.mxu0 %v634
    %743 = vmatprep.subr.mxu0 %v639
    %744 = vmatpush1.msra.mxu0 %v638
    %745 = vmatprep.subr.mxu0 0.0
    %746 = vmatpush1.msra.mxu0 0.0
    %747 = vmatprep.subr.mxu0 0.0
    %748 = vmatpush1.msra.mxu0 0.0
    %749 = vmatprep.subr.mxu0 0.0
    %750 = vmatpush1.msra.mxu0 0.0
    %751 = vmatprep.subr.mxu0 0.0
    %752 = vmatpush1.msra.mxu0 0.0
    %753 = vmatprep.subr.mxu0 0.0
    %754 = vmatpush1.msra.mxu0 0.0
    %755 = vmatprep.subr.mxu0 0.0
    %756 = vmatpush1.msra.mxu0 0.0
    %757 = vmatprep.subr.mxu0 0.0
    %758 = vmatpush1.msra.mxu0 0.0
    %759 = vmatprep.subr.mxu0 0.0
    %760 = vmatpush1.msra.mxu0 0.0
    %761 = vmatprep.subr.mxu0 0.0
    %762 = vmatpush1.msra.mxu0 0.0
    %763 = vmatprep.subr.mxu0 0.0
    %764 = vmatpush1.msra.mxu0 0.0
    %765 = vmatprep.subr.mxu0 0.0
    %766 = vmatpush1.msra.mxu0 0.0
    %767 = vmatprep.subr.mxu0 0.0
    %768 = vmatpush1.msra.mxu0 0.0
    %769 = vmatprep.subr.mxu0 0.0
    %770 = vmatpush1.msra.mxu0 0.0
    %771 = vmatprep.subr.mxu0 0.0
    %772 = vmatpush1.msra.mxu0 0.0
    %773 = vmatprep.subr.mxu0 0.0
    %774 = vmatpush1.msra.mxu0 0.0
    %775 = vmatprep.subr.mxu0 0.0
    %776 = vmatpush1.msra.mxu0 0.0
    %777 = vmatprep.mubr.f32.mxu0 0.0
    %778 = vmatmul.mubr.f32.gmra.mrb[0].mxu0 %v575
    %v779 = vpop.f32.mrb[0].mxu0
    %v780 = vadd.f32 0.0, %v779
    %v781 = vpop.f32.mrb[0].mxu0
    %v782 = vadd.f32 0.0, %v781
    %783 = vdwg.mxu0
    %784 = vst [vmem:[#allocation2] sm:$0xff] %v709
    %785 = vst [vmem:[#allocation2 + $0x8] sm:$0xff] %v711
    %786 = vst [vmem:[#allocation2 + $0x10] sm:$0xff] %v780
    %787 = vst [vmem:[#allocation2 + $0x18] sm:$0xff] %v782
    %v788 = vld [vmem:[#allocation2] sm:$0xff]
    %v789 = vld [vmem:[#allocation2 + $0x8] sm:$0xff]
    %v790 = vld [vmem:[#allocation2 + $0x10] sm:$0xff]
    %v791 = vld [vmem:[#allocation2 + $0x18] sm:$0xff]
    %vm792 = vcmask 261120
    %v794 = vsel %vm792, %v640, 0
    %v797 = vsel %vm792, %v641, 0
    %799 = vmatprep.subr.mxu0 0.0
    %800 = vmatpush1.msra.mxu0 %v788
    %801 = vmatprep.subr.mxu0 0.0
    %802 = vmatpush1.msra.mxu0 %v789
    %803 = vmatprep.subr.mxu0 0.0
    %804 = vmatpush1.msra.mxu0 %v790
    %805 = vmatprep.subr.mxu0 0.0
    %806 = vmatpush1.msra.mxu0 %v791
    %807 = vmatprep.subr.mxu0 0.0
    %808 = vmatpush1.msra.mxu0 0.0
    %809 = vmatprep.subr.mxu0 0.0
    %810 = vmatpush1.msra.mxu0 0.0
    %811 = vmatprep.subr.mxu0 0.0
    %812 = vmatpush1.msra.mxu0 0.0
    %813 = vmatprep.subr.mxu0 0.0
    %814 = vmatpush1.msra.mxu0 0.0
    %815 = vmatprep.subr.mxu0 0.0
    %816 = vmatpush1.msra.mxu0 0.0
    %817 = vmatprep.subr.mxu0 0.0
    %818 = vmatpush1.msra.mxu0 0.0
    %819 = vmatprep.subr.mxu0 0.0
    %820 = vmatpush1.msra.mxu0 0.0
    %821 = vmatprep.subr.mxu0 0.0
    %822 = vmatpush1.msra.mxu0 0.0
    %823 = vmatprep.subr.mxu0 0.0
    %824 = vmatpush1.msra.mxu0 0.0
    %825 = vmatprep.subr.mxu0 0.0
    %826 = vmatpush1.msra.mxu0 0.0
    %827 = vmatprep.subr.mxu0 0.0
    %828 = vmatpush1.msra.mxu0 0.0
    %829 = vmatprep.subr.mxu0 0.0
    %830 = vmatpush1.msra.mxu0 0.0
    %831 = vmatprep.subr.mxu0 0.0
    %832 = vmatpush1.msra.mxu0 0.0
    %833 = vmatprep.subr.mxu0 0.0
    %834 = vmatpush1.msra.mxu0 0.0
    %835 = vmatprep.subr.mxu0 0.0
    %836 = vmatpush1.msra.mxu0 0.0
    %837 = vmatprep.subr.mxu0 0.0
    %838 = vmatpush1.msra.mxu0 0.0
    %839 = vmatprep.subr.mxu0 0.0
    %840 = vmatpush1.msra.mxu0 0.0
    %841 = vmatprep.subr.mxu0 0.0
    %842 = vmatpush1.msra.mxu0 0.0
    %843 = vmatprep.subr.mxu0 0.0
    %844 = vmatpush1.msra.mxu0 0.0
    %845 = vmatprep.subr.mxu0 0.0
    %846 = vmatpush1.msra.mxu0 0.0
    %847 = vmatprep.subr.mxu0 0.0
    %848 = vmatpush1.msra.mxu0 0.0
    %849 = vmatprep.subr.mxu0 0.0
    %850 = vmatpush1.msra.mxu0 0.0
    %851 = vmatprep.subr.mxu0 0.0
    %852 = vmatpush1.msra.mxu0 0.0
    %853 = vmatprep.subr.mxu0 0.0
    %854 = vmatpush1.msra.mxu0 0.0
    %855 = vmatprep.subr.mxu0 0.0
    %856 = vmatpush1.msra.mxu0 0.0
    %857 = vmatprep.subr.mxu0 0.0
    %858 = vmatpush1.msra.mxu0 0.0
    %859 = vmatprep.subr.mxu0 0.0
    %860 = vmatpush1.msra.mxu0 0.0
    %861 = vmatprep.subr.mxu0 0.0
    %862 = vmatpush1.msra.mxu0 0.0
    %863 = vmatprep.mubr.f32.mxu0 0.0
    %864 = vmatmul.mubr.f32.gmra.mrb[0].mxu0 %v794
    %v865 = vpop.f32.mrb[0].mxu0
    %v866 = vadd.f32 0.0, %v865
    %v867 = vpop.f32.mrb[0].mxu0
    %868 = vmatprep.mubr.f32.mxu0 0.0
    %869 = vmatmul.mubr.f32.gmra.mrb[0].mxu0 %v797
    %v870 = vpop.f32.mrb[0].mxu0
    %v871 = vadd.f32 0.0, %v870
    %v872 = vpop.f32.mrb[0].mxu0
    %873 = vdwg.mxu0
    %v874 = vld [vmem:[#allocation14] sm:$0xff]
    %v875 = vld [vmem:[#allocation14 + $0x8] sm:$0xff]
    %v876 = vld [vmem:[#allocation14 + $0x10] sm:$0xff]
    %v877 = vld [vmem:[#allocation14 + $0x18] sm:$0xff]
    %v878 = vld [vmem:[#allocation14 + $0x20] sm:$0xff]
    %v879 = vld [vmem:[#allocation14 + $0x28] sm:$0xff]
    %v880 = vld [vmem:[#allocation14 + $0x30] sm:$0xff]
    %v881 = vld [vmem:[#allocation14 + $0x38] sm:$0xff]
    %v882 = vld [vmem:[#allocation14 + $0x40] sm:$0xff]
    %v883 = vld [vmem:[#allocation14 + $0x48] sm:$0xff]
    %v884 = vld [vmem:[#allocation14 + $0x50] sm:$0xff]
    %v885 = vld [vmem:[#allocation14 + $0x58] sm:$0xff]
    %v886 = vld [vmem:[#allocation14 + $0x60] sm:$0xff]
    %v887 = vld [vmem:[#allocation14 + $0x68] sm:$0xff]
    %v888 = vld [vmem:[#allocation14 + $0x70] sm:$0xff]
    %v889 = vld [vmem:[#allocation14 + $0x78] sm:$0xff]
    %v890 = vld [vmem:[#allocation13] sm:$0x3]
    %v891 = vadd.f32 %v866, %v871
    %v892 = vrot.slane %v891, 4
    %v893 = vadd.f32 %v891, %v892
    %v894 = vrot.slane %v893, 2
    %v895 = vadd.f32 %v893, %v894
    %v896 = vrot.slane %v895, 1
    %v897 = vadd.f32 %v895, %v896
    %898 = vst [vmem:[#allocation2] sm:$0x1] %v897
    %v899 = vmul.f32 %v866, %v866
    %v900 = vmul.f32 %v871, %v871
    %v901 = vadd.f32 %v899, %v900
    %v902 = vrot.slane %v901, 4
    %v903 = vadd.f32 %v901, %v902
    %v904 = vrot.slane %v903, 2
    %v905 = vadd.f32 %v903, %v904
    %v906 = vrot.slane %v905, 1
    %v907 = vadd.f32 %v905, %v906
    %908 = vst [vmem:[#allocation2 + $0x1] sm:$0x1] %v907
    %v909 = vld [vmem:[#allocation2] sm:$0x3]
    %910 = vmatprep.subr.mxu0 0.0
    %911 = vmatpush1.msra.mxu0 %v874
    %912 = vmatprep.subr.mxu0 0.0
    %913 = vmatpush1.msra.mxu0 %v875
    %914 = vmatprep.subr.mxu0 0.0
    %915 = vmatpush1.msra.mxu0 %v876
    %916 = vmatprep.subr.mxu0 0.0
    %917 = vmatpush1.msra.mxu0 %v877
    %918 = vmatprep.subr.mxu0 0.0
    %919 = vmatpush1.msra.mxu0 %v878
    %920 = vmatprep.subr.mxu0 0.0
    %921 = vmatpush1.msra.mxu0 %v879
    %922 = vmatprep.subr.mxu0 0.0
    %923 = vmatpush1.msra.mxu0 %v880
    %924 = vmatprep.subr.mxu0 0.0
    %925 = vmatpush1.msra.mxu0 %v881
    %926 = vmatprep.subr.mxu0 0.0
    %927 = vmatpush1.msra.mxu0 %v882
    %928 = vmatprep.subr.mxu0 0.0
    %929 = vmatpush1.msra.mxu0 %v883
    %930 = vmatprep.subr.mxu0 0.0
    %931 = vmatpush1.msra.mxu0 %v884
    %932 = vmatprep.subr.mxu0 0.0
    %933 = vmatpush1.msra.mxu0 %v885
    %934 = vmatprep.subr.mxu0 0.0
    %935 = vmatpush1.msra.mxu0 %v886
    %936 = vmatprep.subr.mxu0 0.0
    %937 = vmatpush1.msra.mxu0 %v887
    %938 = vmatprep.subr.mxu0 0.0
    %939 = vmatpush1.msra.mxu0 %v888
    %940 = vmatprep.subr.mxu0 0.0
    %941 = vmatpush1.msra.mxu0 %v889
    %942 = vmatprep.subr.mxu0 0.0
    %943 = vmatpush1.msra.mxu0 0.0
    %944 = vmatprep.subr.mxu0 0.0
    %945 = vmatpush1.msra.mxu0 0.0
    %946 = vmatprep.subr.mxu0 0.0
    %947 = vmatpush1.msra.mxu0 0.0
    %948 = vmatprep.subr.mxu0 0.0
    %949 = vmatpush1.msra.mxu0 0.0
    %950 = vmatprep.subr.mxu0 0.0
    %951 = vmatpush1.msra.mxu0 0.0
    %952 = vmatprep.subr.mxu0 0.0
    %953 = vmatpush1.msra.mxu0 0.0
    %954 = vmatprep.subr.mxu0 0.0
    %955 = vmatpush1.msra.mxu0 0.0
    %956 = vmatprep.subr.mxu0 0.0
    %957 = vmatpush1.msra.mxu0 0.0
    %958 = vmatprep.subr.mxu0 0.0
    %959 = vmatpush1.msra.mxu0 0.0
    %960 = vmatprep.subr.mxu0 0.0
    %961 = vmatpush1.msra.mxu0 0.0
    %962 = vmatprep.subr.mxu0 0.0
    %963 = vmatpush1.msra.mxu0 0.0
    %964 = vmatprep.subr.mxu0 0.0
    %965 = vmatpush1.msra.mxu0 0.0
    %966 = vmatprep.subr.mxu0 0.0
    %967 = vmatpush1.msra.mxu0 0.0
    %968 = vmatprep.subr.mxu0 0.0
    %969 = vmatpush1.msra.mxu0 0.0
    %970 = vmatprep.subr.mxu0 0.0
    %971 = vmatpush1.msra.mxu0 0.0
    %972 = vmatprep.subr.mxu0 0.0
    %973 = vmatpush1.msra.mxu0 0.0
    %974 = vmatprep.mubr.f32.mxu0 0.0
    %975 = vmatmul.mubr.f32.gmra.mrb[0].mxu0 %v909
    %v976 = vpop.f32.mrb[0].mxu0
    %v977 = vadd.f32 0.0, %v976
    %v978 = vpop.f32.mrb[0].mxu0
    %979 = vdwg.mxu0
    %v980 = vmul.f32 %v977, 0.0078125
    %v981 = vmul.f32 %v980, %v980
    %v983 = vrot.slane %v981, 7
    %v985 = vsub.f32 %v980, %v983
    %v986 = vadd.f32 %v985, 1e-05
    %v987 = vrsqrt.pop %v986
    %v989 = vrot.slane %v987, 1
    %v991 = vmul.f32 %v890, %v989
    %v992 = vlaneseq
    %v993 = vshrl.u32 %v992, 7
    %v994 = vsub.s32 0, %v993
    %v995 = vrot.slane %v980, %v994
    %v996 = vsub.f32 %v866, %v995
    %v997 = vsub.f32 %v871, %v995
    %v998 = vlaneseq
    %v999 = vshrl.u32 %v998, 7
    %v1000 = vsub.s32 0, %v999
    %v1001 = vrot.slane %v991, %v1000
    %v1002 = vmul.f32 %v996, %v1001
    %v1003 = vmul.f32 %v997, %v1001
    %v1004 = vlaneseq
    %v1005 = vshrl.u32 %v1004, 7
    %v1006 = vsub.s32 1, %v1005
    %v1007 = vrot.slane %v890, %v1006
    %v1008 = vadd.f32 %v1002, %v1007
    %v1009 = vadd.f32 %v1003, %v1007
    %v1010 = vmax.f32 %v1008, 0.0
    %v1011 = vmax.f32 %v1009, 0.0
    %v1012 = vld [vmem:[#allocation16] sm:$0xff]
    %v1013 = vld [vmem:[#allocation16 + $0x8] sm:$0xff]
    %v1014 = vld [vmem:[#allocation16 + $0x10] sm:$0xff]
    %v1015 = vld [vmem:[#allocation16 + $0x18] sm:$0xff]
    %v1016 = vld [vmem:[#allocation16 + $0x20] sm:$0xff]
    %v1017 = vld [vmem:[#allocation16 + $0x28] sm:$0xff]
    %v1018 = vld [vmem:[#allocation16 + $0x30] sm:$0xff]
    %v1019 = vld [vmem:[#allocation16 + $0x38] sm:$0xff]
    %v1020 = vld [vmem:[#allocation16 + $0x40] sm:$0xff]
    %v1021 = vld [vmem:[#allocation16 + $0x48] sm:$0xff]
    %v1022 = vld [vmem:[#allocation16 + $0x50] sm:$0xff]
    %v1023 = vld [vmem:[#allocation16 + $0x58] sm:$0xff]
    %v1024 = vld [vmem:[#allocation16 + $0x60] sm:$0xff]
    %v1025 = vld [vmem:[#allocation16 + $0x68] sm:$0xff]
    %v1026 = vld [vmem:[#allocation16 + $0x70] sm:$0xff]
    %v1027 = vld [vmem:[#allocation16 + $0x78] sm:$0xff]
    %v1028 = vld [vmem:[#allocation16 + $0x80] sm:$0xff]
    %v1029 = vld [vmem:[#allocation16 + $0x88] sm:$0xff]
    %v1030 = vld [vmem:[#allocation16 + $0x90] sm:$0xff]
    %v1031 = vld [vmem:[#allocation16 + $0x98] sm:$0xff]
    %v1032 = vld [vmem:[#allocation16 + $0xa0] sm:$0xff]
    %v1033 = vld [vmem:[#allocation16 + $0xa8] sm:$0xff]
    %v1034 = vld [vmem:[#allocation16 + $0xb0] sm:$0xff]
    %v1035 = vld [vmem:[#allocation16 + $0xb8] sm:$0xff]
    %v1036 = vld [vmem:[#allocation16 + $0xc0] sm:$0xff]
    %v1037 = vld [vmem:[#allocation16 + $0xc8] sm:$0xff]
    %v1038 = vld [vmem:[#allocation16 + $0xd0] sm:$0xff]
    %v1039 = vld [vmem:[#allocation16 + $0xd8] sm:$0xff]
    %v1040 = vld [vmem:[#allocation16 + $0xe0] sm:$0xff]
    %v1041 = vld [vmem:[#allocation16 + $0xe8] sm:$0xff]
    %v1042 = vld [vmem:[#allocation16 + $0xf0] sm:$0xff]
    %v1043 = vld [vmem:[#allocation16 + $0xf8] sm:$0xff]
    %v1044 = vld [vmem:[#allocation16 + $0x100] sm:$0xff]
    %v1045 = vld [vmem:[#allocation16 + $0x108] sm:$0xff]
    %v1046 = vld [vmem:[#allocation16 + $0x110] sm:$0xff]
    %v1047 = vld [vmem:[#allocation16 + $0x118] sm:$0xff]
    %v1048 = vld [vmem:[#allocation16 + $0x120] sm:$0xff]
    %v1049 = vld [vmem:[#allocation16 + $0x128] sm:$0xff]
    %v1050 = vld [vmem:[#allocation16 + $0x130] sm:$0xff]
    %v1051 = vld [vmem:[#allocation16 + $0x138] sm:$0xff]
    %v1052 = vld [vmem:[#allocation16 + $0x140] sm:$0xff]
    %v1053 = vld [vmem:[#allocation16 + $0x148] sm:$0xff]
    %v1054 = vld [vmem:[#allocation16 + $0x150] sm:$0xff]
    %v1055 = vld [vmem:[#allocation16 + $0x158] sm:$0xff]
    %v1056 = vld [vmem:[#allocation16 + $0x160] sm:$0xff]
    %v1057 = vld [vmem:[#allocation16 + $0x168] sm:$0xff]
    %v1058 = vld [vmem:[#allocation16 + $0x170] sm:$0xff]
    %v1059 = vld [vmem:[#allocation16 + $0x178] sm:$0xff]
    %v1060 = vld [vmem:[#allocation16 + $0x180] sm:$0xff]
    %v1061 = vld [vmem:[#allocation16 + $0x188] sm:$0xff]
    %v1062 = vld [vmem:[#allocation16 + $0x190] sm:$0xff]
    %v1063 = vld [vmem:[#allocation16 + $0x198] sm:$0xff]
    %v1064 = vld [vmem:[#allocation16 + $0x1a0] sm:$0xff]
    %v1065 = vld [vmem:[#allocation16 + $0x1a8] sm:$0xff]
    %v1066 = vld [vmem:[#allocation16 + $0x1b0] sm:$0xff]
    %v1067 = vld [vmem:[#allocation16 + $0x1b8] sm:$0xff]
    %v1068 = vld [vmem:[#allocation16 + $0x1c0] sm:$0xff]
    %v1069 = vld [vmem:[#allocation16 + $0x1c8] sm:$0xff]
    %v1070 = vld [vmem:[#allocation16 + $0x1d0] sm:$0xff]
    %v1071 = vld [vmem:[#allocation16 + $0x1d8] sm:$0xff]
    %v1072 = vld [vmem:[#allocation16 + $0x1e0] sm:$0xff]
    %v1073 = vld [vmem:[#allocation16 + $0x1e8] sm:$0xff]
    %v1074 = vld [vmem:[#allocation16 + $0x1f0] sm:$0xff]
    %v1075 = vld [vmem:[#allocation16 + $0x1f8] sm:$0xff]
    %v1076 = vld [vmem:[%s9] sm:$0xff]
    %v1077 = vld [vmem:[%s9 + $0x8] sm:$0xff]
    %v1078 = vld [vmem:[%s9 + $0x10] sm:$0xff]
    %v1079 = vld [vmem:[%s9 + $0x18] sm:$0xff]
    %1080 = vmatprep.subr.mxu0 %v1013
    %1081 = vmatpush1.msra.mxu0 %v1012
    %1082 = vmatprep.subr.mxu0 %v1017
    %1083 = vmatpush1.msra.mxu0 %v1016
    %1084 = vmatprep.subr.mxu0 %v1021
    %1085 = vmatpush1.msra.mxu0 %v1020
    %1086 = vmatprep.subr.mxu0 %v1025
    %1087 = vmatpush1.msra.mxu0 %v1024
    %1088 = vmatprep.subr.mxu0 %v1029
    %1089 = vmatpush1.msra.mxu0 %v1028
    %1090 = vmatprep.subr.mxu0 %v1033
    %1091 = vmatpush1.msra.mxu0 %v1032
    %1092 = vmatprep.subr.mxu0 %v1037
    %1093 = vmatpush1.msra.mxu0 %v1036
    %1094 = vmatprep.subr.mxu0 %v1041
    %1095 = vmatpush1.msra.mxu0 %v1040
    %1096 = vmatprep.subr.mxu0 %v1045
    %1097 = vmatpush1.msra.mxu0 %v1044
    %1098 = vmatprep.subr.mxu0 %v1049
    %1099 = vmatpush1.msra.mxu0 %v1048
    %1100 = vmatprep.subr.mxu0 %v1053
    %1101 = vmatpush1.msra.mxu0 %v1052
    %1102 = vmatprep.subr.mxu0 %v1057
    %1103 = vmatpush1.msra.mxu0 %v1056
    %1104 = vmatprep.subr.mxu0 %v1061
    %1105 = vmatpush1.msra.mxu0 %v1060
    %1106 = vmatprep.subr.mxu0 %v1065
    %1107 = vmatpush1.msra.mxu0 %v1064
    %1108 = vmatprep.subr.mxu0 %v1069
    %1109 = vmatpush1.msra.mxu0 %v1068
    %1110 = vmatprep.subr.mxu0 %v1073
    %1111 = vmatpush1.msra.mxu0 %v1072
    %1112 = vmatprep.subr.mxu0 0.0
    %1113 = vmatpush1.msra.mxu0 0.0
    %1114 = vmatprep.subr.mxu0 0.0
    %1115 = vmatpush1.msra.mxu0 0.0
    %1116 = vmatprep.subr.mxu0 0.0
    %1117 = vmatpush1.msra.mxu0 0.0
    %1118 = vmatprep.subr.mxu0 0.0
    %1119 = vmatpush1.msra.mxu0 0.0
    %1120 = vmatprep.subr.mxu0 0.0
    %1121 = vmatpush1.msra.mxu0 0.0
    %1122 = vmatprep.subr.mxu0 0.0
    %1123 = vmatpush1.msra.mxu0 0.0
    %1124 = vmatprep.subr.mxu0 0.0
    %1125 = vmatpush1.msra.mxu0 0.0
    %1126 = vmatprep.subr.mxu0 0.0
    %1127 = vmatpush1.msra.mxu0 0.0
    %1128 = vmatprep.subr.mxu0 0.0
    %1129 = vmatpush1.msra.mxu0 0.0
    %1130 = vmatprep.subr.mxu0 0.0
    %1131 = vmatpush1.msra.mxu0 0.0
    %1132 = vmatprep.subr.mxu0 0.0
    %1133 = vmatpush1.msra.mxu0 0.0
    %1134 = vmatprep.subr.mxu0 0.0
    %1135 = vmatpush1.msra.mxu0 0.0
    %1136 = vmatprep.subr.mxu0 0.0
    %1137 = vmatpush1.msra.mxu0 0.0
    %1138 = vmatprep.subr.mxu0 0.0
    %1139 = vmatpush1.msra.mxu0 0.0
    %1140 = vmatprep.subr.mxu0 0.0
    %1141 = vmatpush1.msra.mxu0 0.0
    %1142 = vmatprep.subr.mxu0 0.0
    %1143 = vmatpush1.msra.mxu0 0.0
    %1144 = vmatprep.mubr.f32.mxu0 0.0
    %1145 = vmatmul.mubr.f32.gmra.mrb[0].mxu0 %v1010
    %v1146 = vpop.f32.mrb[0].mxu0
    %v1147 = vadd.f32 0.0, %v1146
    %v1148 = vpop.f32.mrb[0].mxu0
    %v1149 = vadd.f32 0.0, %v1148
    %1150 = vmatprep.mubr.f32.mxu0 0.0
    %1151 = vmatmul.mubr.f32.gmra.mrb[0].mxu0 %v1011
    %v1152 = vpop.f32.mrb[0].mxu0
    %v1153 = vadd.f32 0.0, %v1152
    %v1154 = vpop.f32.mrb[0].mxu0
    %v1155 = vadd.f32 0.0, %v1154
    %1156 = vdwg.mxu0
    %1157 = vmatprep.subr.mxu0 %v1015
    %1158 = vmatpush1.msra.mxu0 %v1014
    %1159 = vmatprep.subr.mxu0 %v1019
    %1160 = vmatpush1.msra.mxu0 %v1018
    %1161 = vmatprep.subr.mxu0 %v1023
    %1162 = vmatpush1.msra.mxu0 %v1022
    %1163 = vmatprep.subr.mxu0 %v1027
    %1164 = vmatpush1.msra.mxu0 %v1026
    %1165 = vmatprep.subr.mxu0 %v1031
    %1166 = vmatpush1.msra.mxu0 %v1030
    %1167 = vmatprep.subr.mxu0 %v1035
    %1168 = vmatpush1.msra.mxu0 %v1034
    %1169 = vmatprep.subr.mxu0 %v1039
    %1170 = vmatpush1.msra.mxu0 %v1038
    %1171 = vmatprep.subr.mxu0 %v1043
    %1172 = vmatpush1.msra.mxu0 %v1042
    %1173 = vmatprep.subr.mxu0 %v1047
    %1174 = vmatpush1.msra.mxu0 %v1046
    %1175 = vmatprep.subr.mxu0 %v1051
    %1176 = vmatpush1.msra.mxu0 %v1050
    %1177 = vmatprep.subr.mxu0 %v1055
    %1178 = vmatpush1.msra.mxu0 %v1054
    %1179 = vmatprep.subr.mxu0 %v1059
    %1180 = vmatpush1.msra.mxu0 %v1058
    %1181 = vmatprep.subr.mxu0 %v1063
    %1182 = vmatpush1.msra.mxu0 %v1062
    %1183 = vmatprep.subr.mxu0 %v1067
    %1184 = vmatpush1.msra.mxu0 %v1066
    %1185 = vmatprep.subr.mxu0 %v1071
    %1186 = vmatpush1.msra.mxu0 %v1070
    %1187 = vmatprep.subr.mxu0 %v1075
    %1188 = vmatpush1.msra.mxu0 %v1074
    %1189 = vmatprep.subr.mxu0 0.0
    %1190 = vmatpush1.msra.mxu0 0.0
    %1191 = vmatprep.subr.mxu0 0.0
    %1192 = vmatpush1.msra.mxu0 0.0
    %1193 = vmatprep.subr.mxu0 0.0
    %1194 = vmatpush1.msra.mxu0 0.0
    %1195 = vmatprep.subr.mxu0 0.0
    %1196 = vmatpush1.msra.mxu0 0.0
    %1197 = vmatprep.subr.mxu0 0.0
    %1198 = vmatpush1.msra.mxu0 0.0
    %1199 = vmatprep.subr.mxu0 0.0
    %1200 = vmatpush1.msra.mxu0 0.0
    %1201 = vmatprep.subr.mxu0 0.0
    %1202 = vmatpush1.msra.mxu0 0.0
    %1203 = vmatprep.subr.mxu0 0.0
    %1204 = vmatpush1.msra.mxu0 0.0
    %1205 = vmatprep.subr.mxu0 0.0
    %1206 = vmatpush1.msra.mxu0 0.0
    %1207 = vmatprep.subr.mxu0 0.0
    %1208 = vmatpush1.msra.mxu0 0.0
    %1209 = vmatprep.subr.mxu0 0.0
    %1210 = vmatpush1.msra.mxu0 0.0
    %1211 = vmatprep.subr.mxu0 0.0
    %1212 = vmatpush1.msra.mxu0 0.0
    %1213 = vmatprep.subr.mxu0 0.0
    %1214 = vmatpush1.msra.mxu0 0.0
    %1215 = vmatprep.subr.mxu0 0.0
    %1216 = vmatpush1.msra.mxu0 0.0
    %1217 = vmatprep.subr.mxu0 0.0
    %1218 = vmatpush1.msra.mxu0 0.0
    %1219 = vmatprep.subr.mxu0 0.0
    %1220 = vmatpush1.msra.mxu0 0.0
    %1221 = vmatprep.mubr.f32.mxu0 0.0
    %1222 = vmatmul.mubr.f32.gmra.mrb[0].mxu0 %v1010
    %v1223 = vpop.f32.mrb[0].mxu0
    %v1224 = vadd.f32 0.0, %v1223
    %v1225 = vpop.f32.mrb[0].mxu0
    %v1226 = vadd.f32 0.0, %v1225
    %1227 = vmatprep.mubr.f32.mxu0 0.0
    %1228 = vmatmul.mubr.f32.gmra.mrb[0].mxu0 %v1011
    %v1229 = vpop.f32.mrb[0].mxu0
    %v1230 = vadd.f32 0.0, %v1229
    %v1231 = vpop.f32.mrb[0].mxu0
    %v1232 = vadd.f32 0.0, %v1231
    %1233 = vdwg.mxu0
    %1234 = vst [vmem:[#allocation2] sm:$0xff] %v1147
    %1235 = vst [vmem:[#allocation2 + $0x8] sm:$0xff] %v1153
    %1236 = vst [vmem:[#allocation2 + $0x10] sm:$0xff] %v1149
    %1237 = vst [vmem:[#allocation2 + $0x18] sm:$0xff] %v1155
    %1238 = vst [vmem:[#allocation2 + $0x20] sm:$0xff] %v1224
    %1239 = vst [vmem:[#allocation2 + $0x28] sm:$0xff] %v1230
    %1240 = vst [vmem:[#allocation2 + $0x30] sm:$0xff] %v1226
    %1241 = vst [vmem:[#allocation2 + $0x38] sm:$0xff] %v1232
    %v1242 = vld [vmem:[#allocation2] sm:$0xff]
    %v1243 = vld [vmem:[#allocation2 + $0x8] sm:$0xff]
    %v1244 = vld [vmem:[#allocation2 + $0x10] sm:$0xff]
    %v1245 = vld [vmem:[#allocation2 + $0x18] sm:$0xff]
    %v1246 = vld [vmem:[#allocation2 + $0x20] sm:$0xff]
    %v1247 = vld [vmem:[#allocation2 + $0x28] sm:$0xff]
    %v1248 = vld [vmem:[#allocation2 + $0x30] sm:$0xff]
    %v1249 = vld [vmem:[#allocation2 + $0x38] sm:$0xff]
    %vm1250 = vcmask 523264
    %v1252 = vsel %vm1250, %v1076, 0
    %v1255 = vsel %vm1250, %v1077, 0
    %v1258 = vsel %vm1250, %v1078, 0
    %v1261 = vsel %vm1250, %v1079, 0
    %1263 = vmatprep.subr.mxu0 0.0
    %1264 = vmatpush1.msra.mxu0 %v1242
    %1265 = vmatprep.subr.mxu0 0.0
    %1266 = vmatpush1.msra.mxu0 %v1243
    %1267 = vmatprep.subr.mxu0 0.0
    %1268 = vmatpush1.msra.mxu0 %v1244
    %1269 = vmatprep.subr.mxu0 0.0
    %1270 = vmatpush1.msra.mxu0 %v1245
    %1271 = vmatprep.subr.mxu0 0.0
    %1272 = vmatpush1.msra.mxu0 %v1246
    %1273 = vmatprep.subr.mxu0 0.0
    %1274 = vmatpush1.msra.mxu0 %v1247
    %1275 = vmatprep.subr.mxu0 0.0
    %1276 = vmatpush1.msra.mxu0 %v1248
    %1277 = vmatprep.subr.mxu0 0.0
    %1278 = vmatpush1.msra.mxu0 %v1249
    %1279 = vmatprep.subr.mxu0 0.0
    %1280 = vmatpush1.msra.mxu0 0.0
    %1281 = vmatprep.subr.mxu0 0.0
    %1282 = vmatpush1.msra.mxu0 0.0
    %1283 = vmatprep.subr.mxu0 0.0
    %1284 = vmatpush1.msra.mxu0 0.0
    %1285 = vmatprep.subr.mxu0 0.0
    %1286 = vmatpush1.msra.mxu0 0.0
    %1287 = vmatprep.subr.mxu0 0.0
    %1288 = vmatpush1.msra.mxu0 0.0
    %1289 = vmatprep.subr.mxu0 0.0
    %1290 = vmatpush1.msra.mxu0 0.0
    %1291 = vmatprep.subr.mxu0 0.0
    %1292 = vmatpush1.msra.mxu0 0.0
    %1293 = vmatprep.subr.mxu0 0.0
    %1294 = vmatpush1.msra.mxu0 0.0
    %1295 = vmatprep.subr.mxu0 0.0
    %1296 = vmatpush1.msra.mxu0 0.0
    %1297 = vmatprep.subr.mxu0 0.0
    %1298 = vmatpush1.msra.mxu0 0.0
    %1299 = vmatprep.subr.mxu0 0.0
    %1300 = vmatpush1.msra.mxu0 0.0
    %1301 = vmatprep.subr.mxu0 0.0
    %1302 = vmatpush1.msra.mxu0 0.0
    %1303 = vmatprep.subr.mxu0 0.0
    %1304 = vmatpush1.msra.mxu0 0.0
    %1305 = vmatprep.subr.mxu0 0.0
    %1306 = vmatpush1.msra.mxu0 0.0
    %1307 = vmatprep.subr.mxu0 0.0
    %1308 = vmatpush1.msra.mxu0 0.0
    %1309 = vmatprep.subr.mxu0 0.0
    %1310 = vmatpush1.msra.mxu0 0.0
    %1311 = vmatprep.subr.mxu0 0.0
    %1312 = vmatpush1.msra.mxu0 0.0
    %1313 = vmatprep.subr.mxu0 0.0
    %1314 = vmatpush1.msra.mxu0 0.0
    %1315 = vmatprep.subr.mxu0 0.0
    %1316 = vmatpush1.msra.mxu0 0.0
    %1317 = vmatprep.subr.mxu0 0.0
    %1318 = vmatpush1.msra.mxu0 0.0
    %1319 = vmatprep.subr.mxu0 0.0
    %1320 = vmatpush1.msra.mxu0 0.0
    %1321 = vmatprep.subr.mxu0 0.0
    %1322 = vmatpush1.msra.mxu0 0.0
    %1323 = vmatprep.subr.mxu0 0.0
    %1324 = vmatpush1.msra.mxu0 0.0
    %1325 = vmatprep.subr.mxu0 0.0
    %1326 = vmatpush1.msra.mxu0 0.0
    %1327 = vmatprep.mubr.f32.mxu0 0.0
    %1328 = vmatmul.mubr.f32.gmra.mrb[0].mxu0 %v1252
    %v1329 = vpop.f32.mrb[0].mxu0
    %v1330 = vadd.f32 0.0, %v1329
    %v1331 = vpop.f32.mrb[0].mxu0
    %1332 = vmatprep.mubr.f32.mxu0 0.0
    %1333 = vmatmul.mubr.f32.gmra.mrb[0].mxu0 %v1255
    %v1334 = vpop.f32.mrb[0].mxu0
    %v1335 = vadd.f32 0.0, %v1334
    %v1336 = vpop.f32.mrb[0].mxu0
    %1337 = vmatprep.mubr.f32.mxu0 0.0
    %1338 = vmatmul.mubr.f32.gmra.mrb[0].mxu0 %v1258
    %v1339 = vpop.f32.mrb[0].mxu0
    %v1340 = vadd.f32 0.0, %v1339
    %v1341 = vpop.f32.mrb[0].mxu0
    %1342 = vmatprep.mubr.f32.mxu0 0.0
    %1343 = vmatmul.mubr.f32.gmra.mrb[0].mxu0 %v1261
    %v1344 = vpop.f32.mrb[0].mxu0
    %v1345 = vadd.f32 0.0, %v1344
    %v1346 = vpop.f32.mrb[0].mxu0
    %1347 = vdwg.mxu0
    %v1348 = vld [vmem:[#allocation17] sm:$0xff]
    %v1349 = vld [vmem:[#allocation17 + $0x8] sm:$0xff]
    %v1350 = vld [vmem:[#allocation17 + $0x10] sm:$0xff]
    %v1351 = vld [vmem:[#allocation17 + $0x18] sm:$0xff]
    %v1352 = vld [vmem:[#allocation17 + $0x20] sm:$0xff]
    %v1353 = vld [vmem:[#allocation17 + $0x28] sm:$0xff]
    %v1354 = vld [vmem:[#allocation17 + $0x30] sm:$0xff]
    %v1355 = vld [vmem:[#allocation17 + $0x38] sm:$0xff]
    %v1356 = vld [vmem:[#allocation17 + $0x40] sm:$0xff]
    %v1357 = vld [vmem:[#allocation17 + $0x48] sm:$0xff]
    %v1358 = vld [vmem:[#allocation17 + $0x50] sm:$0xff]
    %v1359 = vld [vmem:[#allocation17 + $0x58] sm:$0xff]
    %v1360 = vld [vmem:[#allocation17 + $0x60] sm:$0xff]
    %v1361 = vld [vmem:[#allocation17 + $0x68] sm:$0xff]
    %v1362 = vld [vmem:[#allocation17 + $0x70] sm:$0xff]
    %v1363 = vld [vmem:[#allocation17 + $0x78] sm:$0xff]
    %v1364 = vld [vmem:[%s11] sm:$0x3]
    %v1365 = vadd.f32 %v1330, %v1335
    %v1366 = vadd.f32 %v1365, %v1340
    %v1367 = vadd.f32 %v1366, %v1345
    %v1368 = vrot.slane %v1367, 4
    %v1369 = vadd.f32 %v1367, %v1368
    %v1370 = vrot.slane %v1369, 2
    %v1371 = vadd.f32 %v1369, %v1370
    %v1372 = vrot.slane %v1371, 1
    %v1373 = vadd.f32 %v1371, %v1372
    %1374 = vst [vmem:[#allocation2] sm:$0x1] %v1373
    %v1375 = vmul.f32 %v1330, %v1330
    %v1376 = vmul.f32 %v1335, %v1335
    %v1377 = vmul.f32 %v1340, %v1340
    %v1378 = vmul.f32 %v1345, %v1345
    %v1379 = vadd.f32 %v1375, %v1376
    %v1380 = vadd.f32 %v1379, %v1377
    %v1381 = vadd.f32 %v1380, %v1378
    %v1382 = vrot.slane %v1381, 4
    %v1383 = vadd.f32 %v1381, %v1382
    %v1384 = vrot.slane %v1383, 2
    %v1385 = vadd.f32 %v1383, %v1384
    %v1386 = vrot.slane %v1385, 1
    %v1387 = vadd.f32 %v1385, %v1386
    %1388 = vst [vmem:[#allocation2 + $0x1] sm:$0x1] %v1387
    %v1389 = vld [vmem:[#allocation2] sm:$0x3]
    %1390 = vmatprep.subr.mxu0 0.0
    %1391 = vmatpush1.msra.mxu0 %v1348
    %1392 = vmatprep.subr.mxu0 0.0
    %1393 = vmatpush1.msra.mxu0 %v1349
    %1394 = vmatprep.subr.mxu0 0.0
    %1395 = vmatpush1.msra.mxu0 %v1350
    %1396 = vmatprep.subr.mxu0 0.0
    %1397 = vmatpush1.msra.mxu0 %v1351
    %1398 = vmatprep.subr.mxu0 0.0
    %1399 = vmatpush1.msra.mxu0 %v1352
    %1400 = vmatprep.subr.mxu0 0.0
    %1401 = vmatpush1.msra.mxu0 %v1353
    %1402 = vmatprep.subr.mxu0 0.0
    %1403 = vmatpush1.msra.mxu0 %v1354
    %1404 = vmatprep.subr.mxu0 0.0
    %1405 = vmatpush1.msra.mxu0 %v1355
    %1406 = vmatprep.subr.mxu0 0.0
    %1407 = vmatpush1.msra.mxu0 %v1356
    %1408 = vmatprep.subr.mxu0 0.0
    %1409 = vmatpush1.msra.mxu0 %v1357
    %1410 = vmatprep.subr.mxu0 0.0
    %1411 = vmatpush1.msra.mxu0 %v1358
    %1412 = vmatprep.subr.mxu0 0.0
    %1413 = vmatpush1.msra.mxu0 %v1359
    %1414 = vmatprep.subr.mxu0 0.0
    %1415 = vmatpush1.msra.mxu0 %v1360
    %1416 = vmatprep.subr.mxu0 0.0
    %1417 = vmatpush1.msra.mxu0 %v1361
    %1418 = vmatprep.subr.mxu0 0.0
    %1419 = vmatpush1.msra.mxu0 %v1362
    %1420 = vmatprep.subr.mxu0 0.0
    %1421 = vmatpush1.msra.mxu0 %v1363
    %1422 = vmatprep.subr.mxu0 0.0
    %1423 = vmatpush1.msra.mxu0 0.0
    %1424 = vmatprep.subr.mxu0 0.0
    %1425 = vmatpush1.msra.mxu0 0.0
    %1426 = vmatprep.subr.mxu0 0.0
    %1427 = vmatpush1.msra.mxu0 0.0
    %1428 = vmatprep.subr.mxu0 0.0
    %1429 = vmatpush1.msra.mxu0 0.0
    %1430 = vmatprep.subr.mxu0 0.0
    %1431 = vmatpush1.msra.mxu0 0.0
    %1432 = vmatprep.subr.mxu0 0.0
    %1433 = vmatpush1.msra.mxu0 0.0
    %1434 = vmatprep.subr.mxu0 0.0
    %1435 = vmatpush1.msra.mxu0 0.0
    %1436 = vmatprep.subr.mxu0 0.0
    %1437 = vmatpush1.msra.mxu0 0.0
    %1438 = vmatprep.subr.mxu0 0.0
    %1439 = vmatpush1.msra.mxu0 0.0
    %1440 = vmatprep.subr.mxu0 0.0
    %1441 = vmatpush1.msra.mxu0 0.0
    %1442 = vmatprep.subr.mxu0 0.0
    %1443 = vmatpush1.msra.mxu0 0.0
    %1444 = vmatprep.subr.mxu0 0.0
    %1445 = vmatpush1.msra.mxu0 0.0
    %1446 = vmatprep.subr.mxu0 0.0
    %1447 = vmatpush1.msra.mxu0 0.0
    %1448 = vmatprep.subr.mxu0 0.0
    %1449 = vmatpush1.msra.mxu0 0.0
    %1450 = vmatprep.subr.mxu0 0.0
    %1451 = vmatpush1.msra.mxu0 0.0
    %1452 = vmatprep.subr.mxu0 0.0
    %1453 = vmatpush1.msra.mxu0 0.0
    %1454 = vmatprep.mubr.f32.mxu0 0.0
    %1455 = vmatmul.mubr.f32.gmra.mrb[0].mxu0 %v1389
    %v1456 = vpop.f32.mrb[0].mxu0
    %v1457 = vadd.f32 0.0, %v1456
    %v1458 = vpop.f32.mrb[0].mxu0
    %1459 = vdwg.mxu0
    %v1460 = vmul.f32 %v1457, 0.001953125
    %v1461 = vmul.f32 %v1460, %v1460
    %v1463 = vrot.slane %v1461, 7
    %v1465 = vsub.f32 %v1460, %v1463
    %v1466 = vadd.f32 %v1465, 1e-05
    %v1467 = vrsqrt.pop %v1466
    %v1469 = vrot.slane %v1467, 1
    %v1471 = vmul.f32 %v1364, %v1469
    %v1472 = vlaneseq
    %v1473 = vshrl.u32 %v1472, 7
    %v1474 = vsub.s32 0, %v1473
    %v1475 = vrot.slane %v1460, %v1474
    %v1476 = vsub.f32 %v1330, %v1475
    %v1477 = vsub.f32 %v1335, %v1475
    %v1478 = vsub.f32 %v1340, %v1475
    %v1479 = vsub.f32 %v1345, %v1475
    %v1480 = vlaneseq
    %v1481 = vshrl.u32 %v1480, 7
    %v1482 = vsub.s32 0, %v1481
    %v1483 = vrot.slane %v1471, %v1482
    %v1484 = vmul.f32 %v1476, %v1483
    %v1485 = vmul.f32 %v1477, %v1483
    %v1486 = vmul.f32 %v1478, %v1483
    %v1487 = vmul.f32 %v1479, %v1483
    %v1488 = vlaneseq
    %v1489 = vshrl.u32 %v1488, 7
    %v1490 = vsub.s32 1, %v1489
    %v1491 = vrot.slane %v1364, %v1490
    %v1492 = vadd.f32 %v1484, %v1491
    %v1493 = vadd.f32 %v1485, %v1491
    %v1494 = vadd.f32 %v1486, %v1491
    %v1495 = vadd.f32 %v1487, %v1491
    %v1496 = vmax.f32 %v1492, 0.0
    %v1497 = vmax.f32 %v1493, 0.0
    %v1498 = vmax.f32 %v1494, 0.0
    %v1499 = vmax.f32 %v1495, 0.0
    %v1500 = vld [vmem:[#allocation20] sm:$0xff]
    %v1501 = vld [vmem:[#allocation20 + $0x8] sm:$0xff]
    %v1502 = vld [vmem:[#allocation20 + $0x10] sm:$0xff]
    %v1503 = vld [vmem:[#allocation20 + $0x18] sm:$0xff]
    %v1504 = vld [vmem:[#allocation20 + $0x20] sm:$0xff]
    %v1505 = vld [vmem:[#allocation20 + $0x28] sm:$0xff]
    %v1506 = vld [vmem:[#allocation20 + $0x30] sm:$0xff]
    %v1507 = vld [vmem:[#allocation20 + $0x38] sm:$0xff]
    %v1508 = vld [vmem:[#allocation20 + $0x40] sm:$0xff]
    %v1509 = vld [vmem:[#allocation20 + $0x48] sm:$0xff]
    %v1510 = vld [vmem:[#allocation20 + $0x50] sm:$0xff]
    %v1511 = vld [vmem:[#allocation20 + $0x58] sm:$0xff]
    %v1512 = vld [vmem:[#allocation20 + $0x60] sm:$0xff]
    %v1513 = vld [vmem:[#allocation20 + $0x68] sm:$0xff]
    %v1514 = vld [vmem:[#allocation20 + $0x70] sm:$0xff]
    %v1515 = vld [vmem:[#allocation20 + $0x78] sm:$0xff]
    %v1516 = vld [vmem:[#allocation20 + $0x80] sm:$0xff]
    %v1517 = vld [vmem:[#allocation20 + $0x88] sm:$0xff]
    %v1518 = vld [vmem:[#allocation20 + $0x90] sm:$0xff]
    %v1519 = vld [vmem:[#allocation20 + $0x98] sm:$0xff]
    %v1520 = vld [vmem:[#allocation20 + $0xa0] sm:$0xff]
    %v1521 = vld [vmem:[#allocation20 + $0xa8] sm:$0xff]
    %v1522 = vld [vmem:[#allocation20 + $0xb0] sm:$0xff]
    %v1523 = vld [vmem:[#allocation20 + $0xb8] sm:$0xff]
    %v1524 = vld [vmem:[#allocation20 + $0xc0] sm:$0xff]
    %v1525 = vld [vmem:[#allocation20 + $0xc8] sm:$0xff]
    %v1526 = vld [vmem:[#allocation20 + $0xd0] sm:$0xff]
    %v1527 = vld [vmem:[#allocation20 + $0xd8] sm:$0xff]
    %v1528 = vld [vmem:[#allocation20 + $0xe0] sm:$0xff]
    %v1529 = vld [vmem:[#allocation20 + $0xe8] sm:$0xff]
    %v1530 = vld [vmem:[#allocation20 + $0xf0] sm:$0xff]
    %v1531 = vld [vmem:[#allocation20 + $0xf8] sm:$0xff]
    %v1532 = vld [vmem:[#allocation20 + $0x100] sm:$0xff]
    %v1533 = vld [vmem:[#allocation20 + $0x108] sm:$0xff]
    %v1534 = vld [vmem:[#allocation20 + $0x110] sm:$0xff]
    %v1535 = vld [vmem:[#allocation20 + $0x118] sm:$0xff]
    %v1536 = vld [vmem:[#allocation20 + $0x120] sm:$0xff]
    %v1537 = vld [vmem:[#allocation20 + $0x128] sm:$0xff]
    %v1538 = vld [vmem:[#allocation20 + $0x130] sm:$0xff]
    %v1539 = vld [vmem:[#allocation20 + $0x138] sm:$0xff]
    %v1540 = vld [vmem:[#allocation20 + $0x140] sm:$0xff]
    %v1541 = vld [vmem:[#allocation20 + $0x148] sm:$0xff]
    %v1542 = vld [vmem:[#allocation20 + $0x150] sm:$0xff]
    %v1543 = vld [vmem:[#allocation20 + $0x158] sm:$0xff]
    %v1544 = vld [vmem:[#allocation20 + $0x160] sm:$0xff]
    %v1545 = vld [vmem:[#allocation20 + $0x168] sm:$0xff]
    %v1546 = vld [vmem:[#allocation20 + $0x170] sm:$0xff]
    %v1547 = vld [vmem:[#allocation20 + $0x178] sm:$0xff]
    %v1548 = vld [vmem:[#allocation20 + $0x180] sm:$0xff]
    %v1549 = vld [vmem:[#allocation20 + $0x188] sm:$0xff]
    %v1550 = vld [vmem:[#allocation20 + $0x190] sm:$0xff]
    %v1551 = vld [vmem:[#allocation20 + $0x198] sm:$0xff]
    %v1552 = vld [vmem:[#allocation20 + $0x1a0] sm:$0xff]
    %v1553 = vld [vmem:[#allocation20 + $0x1a8] sm:$0xff]
    %v1554 = vld [vmem:[#allocation20 + $0x1b0] sm:$0xff]
    %v1555 = vld [vmem:[#allocation20 + $0x1b8] sm:$0xff]
    %v1556 = vld [vmem:[#allocation20 + $0x1c0] sm:$0xff]
    %v1557 = vld [vmem:[#allocation20 + $0x1c8] sm:$0xff]
    %v1558 = vld [vmem:[#allocation20 + $0x1d0] sm:$0xff]
    %v1559 = vld [vmem:[#allocation20 + $0x1d8] sm:$0xff]
    %v1560 = vld [vmem:[#allocation20 + $0x1e0] sm:$0xff]
    %v1561 = vld [vmem:[#allocation20 + $0x1e8] sm:$0xff]
    %v1562 = vld [vmem:[#allocation20 + $0x1f0] sm:$0xff]
    %v1563 = vld [vmem:[#allocation20 + $0x1f8] sm:$0xff]
    %v1564 = vld [vmem:[#allocation19] sm:$0xff]
    %v1565 = vld [vmem:[#allocation19 + $0x8] sm:$0xff]
    %v1566 = vld [vmem:[#allocation19 + $0x10] sm:$0xff]
    %v1567 = vld [vmem:[#allocation19 + $0x18] sm:$0xff]
    %v1568 = vld [vmem:[#allocation19 + $0x20] sm:$0xff]
    %v1569 = vld [vmem:[#allocation19 + $0x28] sm:$0xff]
    %v1570 = vld [vmem:[#allocation19 + $0x30] sm:$0xff]
    %v1571 = vld [vmem:[#allocation19 + $0x38] sm:$0xff]
    %1572 = vmatprep.subr.mxu0 %v1501
    %1573 = vmatpush1.msra.mxu0 %v1500
    %1574 = vmatprep.subr.mxu0 %v1505
    %1575 = vmatpush1.msra.mxu0 %v1504
    %1576 = vmatprep.subr.mxu0 %v1509
    %1577 = vmatpush1.msra.mxu0 %v1508
    %1578 = vmatprep.subr.mxu0 %v1513
    %1579 = vmatpush1.msra.mxu0 %v1512
    %1580 = vmatprep.subr.mxu0 %v1517
    %1581 = vmatpush1.msra.mxu0 %v1516
    %1582 = vmatprep.subr.mxu0 %v1521
    %1583 = vmatpush1.msra.mxu0 %v1520
    %1584 = vmatprep.subr.mxu0 %v1525
    %1585 = vmatpush1.msra.mxu0 %v1524
    %1586 = vmatprep.subr.mxu0 %v1529
    %1587 = vmatpush1.msra.mxu0 %v1528
    %1588 = vmatprep.subr.mxu0 %v1533
    %1589 = vmatpush1.msra.mxu0 %v1532
    %1590 = vmatprep.subr.mxu0 %v1537
    %1591 = vmatpush1.msra.mxu0 %v1536
    %1592 = vmatprep.subr.mxu0 %v1541
    %1593 = vmatpush1.msra.mxu0 %v1540
    %1594 = vmatprep.subr.mxu0 %v1545
    %1595 = vmatpush1.msra.mxu0 %v1544
    %1596 = vmatprep.subr.mxu0 %v1549
    %1597 = vmatpush1.msra.mxu0 %v1548
    %1598 = vmatprep.subr.mxu0 %v1553
    %1599 = vmatpush1.msra.mxu0 %v1552
    %1600 = vmatprep.subr.mxu0 %v1557
    %1601 = vmatpush1.msra.mxu0 %v1556
    %1602 = vmatprep.subr.mxu0 %v1561
    %1603 = vmatpush1.msra.mxu0 %v1560
    %1604 = vmatprep.subr.mxu0 0.0
    %1605 = vmatpush1.msra.mxu0 0.0
    %1606 = vmatprep.subr.mxu0 0.0
    %1607 = vmatpush1.msra.mxu0 0.0
    %1608 = vmatprep.subr.mxu0 0.0
    %1609 = vmatpush1.msra.mxu0 0.0
    %1610 = vmatprep.subr.mxu0 0.0
    %1611 = vmatpush1.msra.mxu0 0.0
    %1612 = vmatprep.subr.mxu0 0.0
    %1613 = vmatpush1.msra.mxu0 0.0
    %1614 = vmatprep.subr.mxu0 0.0
    %1615 = vmatpush1.msra.mxu0 0.0
    %1616 = vmatprep.subr.mxu0 0.0
    %1617 = vmatpush1.msra.mxu0 0.0
    %1618 = vmatprep.subr.mxu0 0.0
    %1619 = vmatpush1.msra.mxu0 0.0
    %1620 = vmatprep.subr.mxu0 0.0
    %1621 = vmatpush1.msra.mxu0 0.0
    %1622 = vmatprep.subr.mxu0 0.0
    %1623 = vmatpush1.msra.mxu0 0.0
    %1624 = vmatprep.subr.mxu0 0.0
    %1625 = vmatpush1.msra.mxu0 0.0
    %1626 = vmatprep.subr.mxu0 0.0
    %1627 = vmatpush1.msra.mxu0 0.0
    %1628 = vmatprep.subr.mxu0 0.0
    %1629 = vmatpush1.msra.mxu0 0.0
    %1630 = vmatprep.subr.mxu0 0.0
    %1631 = vmatpush1.msra.mxu0 0.0
    %1632 = vmatprep.subr.mxu0 0.0
    %1633 = vmatpush1.msra.mxu0 0.0
    %1634 = vmatprep.subr.mxu0 0.0
    %1635 = vmatpush1.msra.mxu0 0.0
    %1636 = vmatprep.mubr.f32.mxu0 0.0
    %1637 = vmatmul.mubr.f32.gmra.mrb[0].mxu0 %v1496
    %v1638 = vpop.f32.mrb[0].mxu0
    %v1639 = vadd.f32 0.0, %v1638
    %v1640 = vpop.f32.mrb[0].mxu0
    %v1641 = vadd.f32 0.0, %v1640
    %1642 = vmatprep.mubr.f32.mxu0 0.0
    %1643 = vmatmul.mubr.f32.gmra.mrb[0].mxu0 %v1497
    %v1644 = vpop.f32.mrb[0].mxu0
    %v1645 = vadd.f32 0.0, %v1644
    %v1646 = vpop.f32.mrb[0].mxu0
    %v1647 = vadd.f32 0.0, %v1646
    %1648 = vmatprep.mubr.f32.mxu0 0.0
    %1649 = vmatmul.mubr.f32.gmra.mrb[0].mxu0 %v1498
    %v1650 = vpop.f32.mrb[0].mxu0
    %v1651 = vadd.f32 0.0, %v1650
    %v1652 = vpop.f32.mrb[0].mxu0
    %v1653 = vadd.f32 0.0, %v1652
    %1654 = vmatprep.mubr.f32.mxu0 0.0
    %1655 = vmatmul.mubr.f32.gmra.mrb[0].mxu0 %v1499
    %v1656 = vpop.f32.mrb[0].mxu0
    %v1657 = vadd.f32 0.0, %v1656
    %v1658 = vpop.f32.mrb[0].mxu0
    %v1659 = vadd.f32 0.0, %v1658
    %1660 = vdwg.mxu0
    %1661 = vmatprep.subr.mxu0 %v1503
    %1662 = vmatpush1.msra.mxu0 %v1502
    %1663 = vmatprep.subr.mxu0 %v1507
    %1664 = vmatpush1.msra.mxu0 %v1506
    %1665 = vmatprep.subr.mxu0 %v1511
    %1666 = vmatpush1.msra.mxu0 %v1510
    %1667 = vmatprep.subr.mxu0 %v1515
    %1668 = vmatpush1.msra.mxu0 %v1514
    %1669 = vmatprep.subr.mxu0 %v1519
    %1670 = vmatpush1.msra.mxu0 %v1518
    %1671 = vmatprep.subr.mxu0 %v1523
    %1672 = vmatpush1.msra.mxu0 %v1522
    %1673 = vmatprep.subr.mxu0 %v1527
    %1674 = vmatpush1.msra.mxu0 %v1526
    %1675 = vmatprep.subr.mxu0 %v1531
    %1676 = vmatpush1.msra.mxu0 %v1530
    %1677 = vmatprep.subr.mxu0 %v1535
    %1678 = vmatpush1.msra.mxu0 %v1534
    %1679 = vmatprep.subr.mxu0 %v1539
    %1680 = vmatpush1.msra.mxu0 %v1538
    %1681 = vmatprep.subr.mxu0 %v1543
    %1682 = vmatpush1.msra.mxu0 %v1542
    %1683 = vmatprep.subr.mxu0 %v1547
    %1684 = vmatpush1.msra.mxu0 %v1546
    %1685 = vmatprep.subr.mxu0 %v1551
    %1686 = vmatpush1.msra.mxu0 %v1550
    %1687 = vmatprep.subr.mxu0 %v1555
    %1688 = vmatpush1.msra.mxu0 %v1554
    %1689 = vmatprep.subr.mxu0 %v1559
    %1690 = vmatpush1.msra.mxu0 %v1558
    %1691 = vmatprep.subr.mxu0 %v1563
    %1692 = vmatpush1.msra.mxu0 %v1562
    %1693 = vmatprep.subr.mxu0 0.0
    %1694 = vmatpush1.msra.mxu0 0.0
    %1695 = vmatprep.subr.mxu0 0.0
    %1696 = vmatpush1.msra.mxu0 0.0
    %1697 = vmatprep.subr.mxu0 0.0
    %1698 = vmatpush1.msra.mxu0 0.0
    %1699 = vmatprep.subr.mxu0 0.0
    %1700 = vmatpush1.msra.mxu0 0.0
    %1701 = vmatprep.subr.mxu0 0.0
    %1702 = vmatpush1.msra.mxu0 0.0
    %1703 = vmatprep.subr.mxu0 0.0
    %1704 = vmatpush1.msra.mxu0 0.0
    %1705 = vmatprep.subr.mxu0 0.0
    %1706 = vmatpush1.msra.mxu0 0.0
    %1707 = vmatprep.subr.mxu0 0.0
    %1708 = vmatpush1.msra.mxu0 0.0
    %1709 = vmatprep.subr.mxu0 0.0
    %1710 = vmatpush1.msra.mxu0 0.0
    %1711 = vmatprep.subr.mxu0 0.0
    %1712 = vmatpush1.msra.mxu0 0.0
    %1713 = vmatprep.subr.mxu0 0.0
    %1714 = vmatpush1.msra.mxu0 0.0
    %1715 = vmatprep.subr.mxu0 0.0
    %1716 = vmatpush1.msra.mxu0 0.0
    %1717 = vmatprep.subr.mxu0 0.0
    %1718 = vmatpush1.msra.mxu0 0.0
    %1719 = vmatprep.subr.mxu0 0.0
    %1720 = vmatpush1.msra.mxu0 0.0
    %1721 = vmatprep.subr.mxu0 0.0
    %1722 = vmatpush1.msra.mxu0 0.0
    %1723 = vmatprep.subr.mxu0 0.0
    %1724 = vmatpush1.msra.mxu0 0.0
    %1725 = vmatprep.mubr.f32.mxu0 0.0
    %1726 = vmatmul.mubr.f32.gmra.mrb[0].mxu0 %v1496
    %v1727 = vpop.f32.mrb[0].mxu0
    %v1728 = vadd.f32 0.0, %v1727
    %v1729 = vpop.f32.mrb[0].mxu0
    %v1730 = vadd.f32 0.0, %v1729
    %1731 = vmatprep.mubr.f32.mxu0 0.0
    %1732 = vmatmul.mubr.f32.gmra.mrb[0].mxu0 %v1497
    %v1733 = vpop.f32.mrb[0].mxu0
    %v1734 = vadd.f32 0.0, %v1733
    %v1735 = vpop.f32.mrb[0].mxu0
    %v1736 = vadd.f32 0.0, %v1735
    %1737 = vmatprep.mubr.f32.mxu0 0.0
    %1738 = vmatmul.mubr.f32.gmra.mrb[0].mxu0 %v1498
    %v1739 = vpop.f32.mrb[0].mxu0
    %v1740 = vadd.f32 0.0, %v1739
    %v1741 = vpop.f32.mrb[0].mxu0
    %v1742 = vadd.f32 0.0, %v1741
    %1743 = vmatprep.mubr.f32.mxu0 0.0
    %1744 = vmatmul.mubr.f32.gmra.mrb[0].mxu0 %v1499
    %v1745 = vpop.f32.mrb[0].mxu0
    %v1746 = vadd.f32 0.0, %v1745
    %v1747 = vpop.f32.mrb[0].mxu0
    %v1748 = vadd.f32 0.0, %v1747
    %1749 = vdwg.mxu0
    %1750 = vst [vmem:[#allocation2] sm:$0xff] %v1639
    %1751 = vst [vmem:[#allocation2 + $0x8] sm:$0xff] %v1645
    %1752 = vst [vmem:[#allocation2 + $0x10] sm:$0xff] %v1651
    %1753 = vst [vmem:[#allocation2 + $0x18] sm:$0xff] %v1657
    %1754 = vst [vmem:[#allocation2 + $0x20] sm:$0xff] %v1641
    %1755 = vst [vmem:[#allocation2 + $0x28] sm:$0xff] %v1647
    %1756 = vst [vmem:[#allocation2 + $0x30] sm:$0xff] %v1653
    %1757 = vst [vmem:[#allocation2 + $0x38] sm:$0xff] %v1659
    %1758 = vst [vmem:[#allocation2 + $0x40] sm:$0xff] %v1728
    %1759 = vst [vmem:[#allocation2 + $0x48] sm:$0xff] %v1734
    %1760 = vst [vmem:[#allocation2 + $0x50] sm:$0xff] %v1740
    %1761 = vst [vmem:[#allocation2 + $0x58] sm:$0xff] %v1746
    %1762 = vst [vmem:[#allocation2 + $0x60] sm:$0xff] %v1730
    %1763 = vst [vmem:[#allocation2 + $0x68] sm:$0xff] %v1736
    %1764 = vst [vmem:[#allocation2 + $0x70] sm:$0xff] %v1742
    %1765 = vst [vmem:[#allocation2 + $0x78] sm:$0xff] %v1748
    %v1766 = vld [vmem:[#allocation2] sm:$0xff]
    %v1767 = vld [vmem:[#allocation2 + $0x8] sm:$0xff]
    %v1768 = vld [vmem:[#allocation2 + $0x10] sm:$0xff]
    %v1769 = vld [vmem:[#allocation2 + $0x18] sm:$0xff]
    %v1770 = vld [vmem:[#allocation2 + $0x20] sm:$0xff]
    %v1771 = vld [vmem:[#allocation2 + $0x28] sm:$0xff]
    %v1772 = vld [vmem:[#allocation2 + $0x30] sm:$0xff]
    %v1773 = vld [vmem:[#allocation2 + $0x38] sm:$0xff]
    %v1774 = vld [vmem:[#allocation2 + $0x40] sm:$0xff]
    %v1775 = vld [vmem:[#allocation2 + $0x48] sm:$0xff]
    %v1776 = vld [vmem:[#allocation2 + $0x50] sm:$0xff]
    %v1777 = vld [vmem:[#allocation2 + $0x58] sm:$0xff]
    %v1778 = vld [vmem:[#allocation2 + $0x60] sm:$0xff]
    %v1779 = vld [vmem:[#allocation2 + $0x68] sm:$0xff]
    %v1780 = vld [vmem:[#allocation2 + $0x70] sm:$0xff]
    %v1781 = vld [vmem:[#allocation2 + $0x78] sm:$0xff]
    %v1782 = vld [vmem:[%s15] sm:$0x1]
    %v1784 = vlaneseq
    %v1785 = vshrl.u32 %v1784, 7
    %v1786 = vsub.s32 0, %v1785
    %v1787 = vrot.slane %v1782, %v1786
    %1789 = vmatprep.subr.mxu0 0.0
    %1790 = vmatpush1.msra.mxu0 %v1766
    %1791 = vmatprep.subr.mxu0 0.0
    %1792 = vmatpush1.msra.mxu0 %v1767
    %1793 = vmatprep.subr.mxu0 0.0
    %1794 = vmatpush1.msra.mxu0 %v1768
    %1795 = vmatprep.subr.mxu0 0.0
    %1796 = vmatpush1.msra.mxu0 %v1769
    %1797 = vmatprep.subr.mxu0 0.0
    %1798 = vmatpush1.msra.mxu0 %v1770
    %1799 = vmatprep.subr.mxu0 0.0
    %1800 = vmatpush1.msra.mxu0 %v1771
    %1801 = vmatprep.subr.mxu0 0.0
    %1802 = vmatpush1.msra.mxu0 %v1772
    %1803 = vmatprep.subr.mxu0 0.0
    %1804 = vmatpush1.msra.mxu0 %v1773
    %1805 = vmatprep.subr.mxu0 0.0
    %1806 = vmatpush1.msra.mxu0 %v1774
    %1807 = vmatprep.subr.mxu0 0.0
    %1808 = vmatpush1.msra.mxu0 %v1775
    %1809 = vmatprep.subr.mxu0 0.0
    %1810 = vmatpush1.msra.mxu0 %v1776
    %1811 = vmatprep.subr.mxu0 0.0
    %1812 = vmatpush1.msra.mxu0 %v1777
    %1813 = vmatprep.subr.mxu0 0.0
    %1814 = vmatpush1.msra.mxu0 %v1778
    %1815 = vmatprep.subr.mxu0 0.0
    %1816 = vmatpush1.msra.mxu0 %v1779
    %1817 = vmatprep.subr.mxu0 0.0
    %1818 = vmatpush1.msra.mxu0 %v1780
    %1819 = vmatprep.subr.mxu0 0.0
    %1820 = vmatpush1.msra.mxu0 %v1781
    %1821 = vmatprep.subr.mxu0 0.0
    %1822 = vmatpush1.msra.mxu0 0.0
    %1823 = vmatprep.subr.mxu0 0.0
    %1824 = vmatpush1.msra.mxu0 0.0
    %1825 = vmatprep.subr.mxu0 0.0
    %1826 = vmatpush1.msra.mxu0 0.0
    %1827 = vmatprep.subr.mxu0 0.0
    %1828 = vmatpush1.msra.mxu0 0.0
    %1829 = vmatprep.subr.mxu0 0.0
    %1830 = vmatpush1.msra.mxu0 0.0
    %1831 = vmatprep.subr.mxu0 0.0
    %1832 = vmatpush1.msra.mxu0 0.0
    %1833 = vmatprep.subr.mxu0 0.0
    %1834 = vmatpush1.msra.mxu0 0.0
    %1835 = vmatprep.subr.mxu0 0.0
    %1836 = vmatpush1.msra.mxu0 0.0
    %1837 = vmatprep.subr.mxu0 0.0
    %1838 = vmatpush1.msra.mxu0 0.0
    %1839 = vmatprep.subr.mxu0 0.0
    %1840 = vmatpush1.msra.mxu0 0.0
    %1841 = vmatprep.subr.mxu0 0.0
    %1842 = vmatpush1.msra.mxu0 0.0
    %1843 = vmatprep.subr.mxu0 0.0
    %1844 = vmatpush1.msra.mxu0 0.0
    %1845 = vmatprep.subr.mxu0 0.0
    %1846 = vmatpush1.msra.mxu0 0.0
    %1847 = vmatprep.subr.mxu0 0.0
    %1848 = vmatpush1.msra.mxu0 0.0
    %1849 = vmatprep.subr.mxu0 0.0
    %1850 = vmatpush1.msra.mxu0 0.0
    %1851 = vmatprep.subr.mxu0 0.0
    %1852 = vmatpush1.msra.mxu0 0.0
    %1853 = vmatprep.mubr.f32.mxu0 0.0
    %1854 = vmatmul.mubr.f32.gmra.mrb[0].mxu0 %v1564
    %v1855 = vpop.f32.mrb[0].mxu0
    %v1856 = vadd.f32 %v1787, %v1855
    %v1857 = vpop.f32.mrb[0].mxu0
    %1858 = vmatprep.mubr.f32.mxu0 0.0
    %1859 = vmatmul.mubr.f32.gmra.mrb[0].mxu0 %v1565
    %v1860 = vpop.f32.mrb[0].mxu0
    %v1861 = vadd.f32 %v1787, %v1860
    %v1862 = vpop.f32.mrb[0].mxu0
    %1863 = vmatprep.mubr.f32.mxu0 0.0
    %1864 = vmatmul.mubr.f32.gmra.mrb[0].mxu0 %v1566
    %v1865 = vpop.f32.mrb[0].mxu0
    %v1866 = vadd.f32 %v1787, %v1865
    %v1867 = vpop.f32.mrb[0].mxu0
    %1868 = vmatprep.mubr.f32.mxu0 0.0
    %1869 = vmatmul.mubr.f32.gmra.mrb[0].mxu0 %v1567
    %v1870 = vpop.f32.mrb[0].mxu0
    %v1871 = vadd.f32 %v1787, %v1870
    %v1872 = vpop.f32.mrb[0].mxu0
    %1873 = vmatprep.mubr.f32.mxu0 0.0
    %1874 = vmatmul.mubr.f32.gmra.mrb[0].mxu0 %v1568
    %v1875 = vpop.f32.mrb[0].mxu0
    %v1876 = vadd.f32 %v1787, %v1875
    %v1877 = vpop.f32.mrb[0].mxu0
    %1878 = vmatprep.mubr.f32.mxu0 0.0
    %1879 = vmatmul.mubr.f32.gmra.mrb[0].mxu0 %v1569
    %v1880 = vpop.f32.mrb[0].mxu0
    %v1881 = vadd.f32 %v1787, %v1880
    %v1882 = vpop.f32.mrb[0].mxu0
    %1883 = vmatprep.mubr.f32.mxu0 0.0
    %1884 = vmatmul.mubr.f32.gmra.mrb[0].mxu0 %v1570
    %v1885 = vpop.f32.mrb[0].mxu0
    %v1886 = vadd.f32 %v1787, %v1885
    %v1887 = vpop.f32.mrb[0].mxu0
    %1888 = vmatprep.mubr.f32.mxu0 0.0
    %1889 = vmatmul.mubr.f32.gmra.mrb[0].mxu0 %v1571
    %v1890 = vpop.f32.mrb[0].mxu0
    %v1891 = vadd.f32 %v1787, %v1890
    %v1892 = vpop.f32.mrb[0].mxu0
    %1893 = vdwg.mxu0
    %v1894 = vtanh.pop %v1856
    %v1895 = vtanh.pop %v1861
    %v1896 = vtanh.pop %v1866
    %v1897 = vtanh.pop %v1871
    %v1898 = vtanh.pop %v1876
    %v1899 = vtanh.pop %v1881
    %v1900 = vtanh.pop %v1886
    %v1901 = vtanh.pop %v1891
    %1902 = vst [vmem:[%s16] sm:$0xff] %v1894
    %1903 = vst [vmem:[%s16 + $0x8] sm:$0xff] %v1895
    %1904 = vst [vmem:[%s16 + $0x10] sm:$0xff] %v1896
    %1905 = vst [vmem:[%s16 + $0x18] sm:$0xff] %v1897
    %1906 = vst [vmem:[%s16 + $0x20] sm:$0xff] %v1898
    %1907 = vst [vmem:[%s16 + $0x28] sm:$0xff] %v1899
    %1908 = vst [vmem:[%s16 + $0x30] sm:$0xff] %v1900
    %1909 = vst [vmem:[%s16 + $0x38] sm:$0xff] %v1901
    // Predicated region
    $region114: #{forward.1} parent=1 // pred_check
      _
    $region115: #{forward.1} parent=1 // pred_check_branch
      %1911 = sbr.rel (0) target = $region117
    $region116: #{forward.1} parent=1 // pred_region
      _
    $region117: #{forward.1} parent=1 // pred_fallthru
      _
    // Predicated region
    $region118: #{forward.1} parent=1 // pred_check
      _
    $region119: #{forward.1} parent=1 // pred_check_branch
      %1913 = sbr.rel (0) target = $region121
    $region120: #{forward.1} parent=1 // pred_region
      _
    $region121: #{forward.1} parent=1 // pred_fallthru
      _
    %1914 = vsyncpa [#allocation4], 1
    %1915 = vsyncpa [#allocation6], 1
    %1916 = vsyncpa [#allocation9], 1
    %1917 = vsyncpa [#allocation12], 1
    %1918 = vsyncpa [#allocation15], 1
    %1919 = vsyncpa [#allocation18], 1
    %1920 = vsyncpa [#allocation21], 1

</llo_original>
